<compile_context>
chip_gen: v7x
topology: tpu7x:2x2x1
jax: 0.10.0
libtpu: 0.0.40
codegen_flags: <defaults>
</compile_context>

<pallas_src>
import functools

import jax
import jax.numpy as jnp
from jax.experimental import pallas as pl
from jax.experimental.pallas import tpu as pltpu


# -----------------------------------------------------------------------------
# Fused kernel: conv1x1+bn1+relu -> conv3x3+bn2+relu -> conv1x1+bn3+residual+relu
# -----------------------------------------------------------------------------
def _bottleneck_fused_kernel(x_ref, w1_ref, s1_ref, b1_ref,
                             w2_ref, s2_ref, b2_ref,
                             w3_ref, s3_ref, b3_ref, o_ref):
    # x_ref : (H, W, Cin)   f32   -- one image (also the residual identity)
    # w1_ref: (Cin, Cw)     bf16
    # w2_ref: (9*Cw, Cw)    bf16  -- (kh, kw, cin)-major rows of the HWIO 3x3 weight
    # w3_ref: (Cw, Co)      bf16
    # s*/b* : (1, C)        f32   -- folded BN scale / bias
    # o_ref : (H, W, Co)    f32
    H, W, Cin = x_ref.shape
    Cw = w1_ref.shape[1]
    Co = o_ref.shape[2]

    x2d = x_ref[...].reshape(H * W, Cin)                       # f32, reused as identity

    # ---- stage 1: conv1 (1x1) + bn1 + relu --------------------------------------
    mid = jnp.dot(x2d.astype(jnp.bfloat16), w1_ref[...],
                  preferred_element_type=jnp.float32)          # (H*W, Cw)
    mid = jnp.maximum(mid * s1_ref[...] + b1_ref[...], 0.0)
    mid = mid.astype(jnp.bfloat16).reshape(H, W, Cw)           # stays in VMEM, bf16

    # ---- stage 2: conv3x3 (SAME pad) as one im2col matmul, bf16 halo assembly ----
    zrow = jnp.zeros((1, W, Cw), jnp.bfloat16)
    zcol = jnp.zeros((H + 2, 1, Cw), jnp.bfloat16)
    xp = jnp.concatenate([zrow, mid, zrow], axis=0)            # (H+2, W,   Cw)
    xp = jnp.concatenate([zcol, xp, zcol], axis=1)             # (H+2, W+2, Cw)
    # kw packing hoisted (done once), then kh packing -> (H, W, 9*Cw) slab
    xp_kw = jnp.concatenate(
        [xp[:, 0:W, :], xp[:, 1:W + 1, :], xp[:, 2:W + 2, :]], axis=-1)   # (H+2, W, 3*Cw)
    slab = jnp.concatenate(
        [xp_kw[0:H], xp_kw[1:H + 1], xp_kw[2:H + 2]], axis=-1)            # (H, W, 9*Cw)
    h2 = jnp.dot(slab.reshape(H * W, 9 * Cw), w2_ref[...],
                 preferred_element_type=jnp.float32)           # single K = 9*Cw dot
    h2 = jnp.maximum(h2 * s2_ref[...] + b2_ref[...], 0.0)      # (H*W, Cw) f32

    # ---- stage 3: conv3 (1x1) + bn3 + residual add + relu -----------------------
    y = jnp.dot(h2.astype(jnp.bfloat16), w3_ref[...],
                preferred_element_type=jnp.float32)            # (H*W, Co)
    y = y * s3_ref[...] + b3_ref[...] + x2d                    # Cin == Co (no downsample)
    o_ref[...] = jnp.maximum(y, 0.0).reshape(H, W, Co).astype(o_ref.dtype)


# -----------------------------------------------------------------------------
# Pallas wrapper (NHWC, single pallas_call)
# -----------------------------------------------------------------------------
def bottleneck_forward_nhwc(x_nhwc, params):
    n, h, w, cin = x_nhwc.shape
    cw = params["w1"].shape[1]
    co = params["w3"].shape[1]
    assert cin == co, "downsample=None requires inplanes == planes * expansion"

    w2r = params["w2"].reshape(9 * cw, cw)      # (kh, kw, cin)-major rows, bf16

    flops = 2 * n * h * w * (cin * cw + 9 * cw * cw + cw * co)
    bytes_accessed = (n * h * w * (cin + co) * 4
                      + (cin * cw + 9 * cw * cw + cw * co) * 2
                      + 2 * (2 * cw + co) * 4)

    return pl.pallas_call(
        _bottleneck_fused_kernel,
        out_shape=jax.ShapeDtypeStruct((n, h, w, co), jnp.float32),
        grid=(n,),
        in_specs=[
            pl.BlockSpec((None, h, w, cin), lambda i: (i, 0, 0, 0)),   # x (one image)
            pl.BlockSpec((cin, cw), lambda i: (0, 0)),                 # w1
            pl.BlockSpec((1, cw), lambda i: (0, 0)),                   # s1
            pl.BlockSpec((1, cw), lambda i: (0, 0)),                   # b1
            pl.BlockSpec((9 * cw, cw), lambda i: (0, 0)),              # w2 (im2col layout)
            pl.BlockSpec((1, cw), lambda i: (0, 0)),                   # s2
            pl.BlockSpec((1, cw), lambda i: (0, 0)),                   # b2
            pl.BlockSpec((cw, co), lambda i: (0, 0)),                  # w3
            pl.BlockSpec((1, co), lambda i: (0, 0)),                   # s3
            pl.BlockSpec((1, co), lambda i: (0, 0)),                   # b3
        ],
        out_specs=pl.BlockSpec((None, h, w, co), lambda i: (i, 0, 0, 0)),
        compiler_params=pltpu.CompilerParams(
            dimension_semantics=("parallel",)),
        cost_estimate=pl.CostEstimate(flops=flops, transcendentals=0,
                                      bytes_accessed=bytes_accessed),
    )(x_nhwc, params["w1"], params["s1"], params["b1"],
      w2r, params["s2"], params["b2"],
      params["w3"], params["s3"], params["b3"])


# -----------------------------------------------------------------------------
# Bottleneck module (parameters + NCHW forward matching the PyTorch interface)
# -----------------------------------------------------------------------------
def _fold_bn(gamma, beta, mean, var, eps=1e-5):
    scale = gamma / jnp.sqrt(var + eps)
    bias = beta - mean * scale
    return (scale.reshape(1, -1).astype(jnp.float32),
            bias.reshape(1, -1).astype(jnp.float32))


def init_bottleneck_params(key, inplanes, planes, base_width=64, groups=1):
    expansion = 4
    width = int(planes * (base_width / 64.0)) * groups
    outp = planes * expansion
    ks = jax.random.split(key, 16)

    def bn(i, c):
        gamma = 1.0 + 0.1 * jax.random.normal(ks[i], (c,), jnp.float32)
        beta = 0.1 * jax.random.normal(ks[i + 1], (c,), jnp.float32)
        mean = 0.05 * jax.random.normal(ks[i + 2], (c,), jnp.float32)
        var = jnp.abs(1.0 + 0.1 * jax.random.normal(ks[i + 3], (c,), jnp.float32))
        return _fold_bn(gamma, beta, mean, var)

    p = {}
    # conv1: 1x1 (inplanes -> width), stored (Cin, Cout), bf16 MXU operand
    p["w1"] = (0.1 * jax.random.normal(ks[0], (inplanes, width), jnp.float32)
               ).astype(jnp.bfloat16)
    p["s1"], p["b1"] = bn(1, width)
    # choice[0]: 3x3 (width -> width), stored HWIO, bf16
    p["w2"] = (0.1 * jax.random.normal(ks[5], (3, 3, width, width), jnp.float32)
               ).astype(jnp.bfloat16)
    p["s2"], p["b2"] = bn(6, width)
    # conv3: 1x1 (width -> planes*expansion), bf16
    p["w3"] = (0.1 * jax.random.normal(ks[10], (width, outp), jnp.float32)
               ).astype(jnp.bfloat16)
    p["s3"], p["b3"] = bn(11, outp)
    return p


@functools.partial(jax.jit, static_argnames=("arch",))
def bottleneck_forward(x_nchw, params, arch=0):
    """x_nchw: (N, C, H, W) float32 -> (N, C_out, H, W) float32."""
    assert arch == 0  # only choice[0] (groups=1, stride=1) exists at module init
    # TODO(synk): keep the surrounding network NHWC (use bottleneck_forward_nhwc) to
    #             remove these boundary HBM transpose passes.
    x = jnp.transpose(x_nchw, (0, 2, 3, 1))            # NCHW -> NHWC
    out = bottleneck_forward_nhwc(x, params)
    return jnp.transpose(out, (0, 3, 1, 2))            # NHWC -> NCHW


# -----------------------------------------------------------------------------
# Pure-JAX reference (same bf16-operand / f32-accumulate precision as the kernel)
# -----------------------------------------------------------------------------
def _reference(x_nchw, p):
    f32 = jnp.float32
    x = jnp.transpose(x_nchw, (0, 2, 3, 1))
    identity = x
    out = jnp.einsum("nhwc,cd->nhwd", x.astype(jnp.bfloat16), p["w1"],
                     preferred_element_type=f32)
    out = jnp.maximum(out * p["s1"] + p["b1"], 0.0).astype(jnp.bfloat16)
    out = jax.lax.conv_general_dilated(
        out, p["w2"], window_strides=(1, 1), padding="SAME",
        dimension_numbers=("NHWC", "HWIO", "NHWC"),
        preferred_element_type=f32)
    out = jnp.maximum(out * p["s2"] + p["b2"], 0.0)
    out = jnp.einsum("nhwc,cd->nhwd", out.astype(jnp.bfloat16), p["w3"],
                     preferred_element_type=f32)
    out = jnp.maximum(out * p["s3"] + p["b3"] + identity, 0.0)
    return jnp.transpose(out, (0, 3, 1, 2))


# -----------------------------------------------------------------------------
if __name__ == "__main__":
    key = jax.random.PRNGKey(0)
    k_x, k_p = jax.random.split(key)

    # downsample=None => inplanes must equal planes*expansion for the residual add.
    # inplanes = out_channels = 128 keeps the residual/output channel axis lane-dense.
    inplanes, planes = 128, 32        # width = 32, output channels = 128
    N, H, W = 2, 16, 16

    x = jax.random.normal(k_x, (N, inplanes, H, W), jnp.float32)
    params = init_bottleneck_params(k_p, inplanes, planes)

    out = jax.block_until_ready(bottleneck_forward(x, params, arch=0))
    ref = _reference(x, params)

    assert out.shape == (N, planes * 4, H, W)
    err = float(jnp.max(jnp.abs(out - ref)))
    assert jnp.allclose(out, ref, atol=1e-2, rtol=1e-2), f"mismatch vs reference: {err}"

    print("KERNEL_OK")
</pallas_src>

<mosaic_0001>
module attributes {stable_mosaic.version = 11 : i64} {
  func.func @_bottleneck_fused_kernel(%arg0: i32, %arg1: memref<1x16x16x128xf32, #tpu.memory_space<vmem>>, %arg2: memref<128x32xbf16, #tpu.memory_space<vmem>>, %arg3: memref<1x32xf32, #tpu.memory_space<vmem>>, %arg4: memref<1x32xf32, #tpu.memory_space<vmem>>, %arg5: memref<288x32xbf16, #tpu.memory_space<vmem>>, %arg6: memref<1x32xf32, #tpu.memory_space<vmem>>, %arg7: memref<1x32xf32, #tpu.memory_space<vmem>>, %arg8: memref<32x128xbf16, #tpu.memory_space<vmem>>, %arg9: memref<1x128xf32, #tpu.memory_space<vmem>>, %arg10: memref<1x128xf32, #tpu.memory_space<vmem>>, %arg11: memref<1x16x16x128xf32, #tpu.memory_space<vmem>>) attributes {dimension_semantics = [#tpu.dimension_semantics<parallel>], iteration_bounds = array<i64: 2>, scalar_prefetch = 0 : i64, scratch_operands = 0 : i64, tpu.core_type = #tpu.core_type<tc>, window_params = [{transform_indices = @transform_0, window_bounds = array<i64: 1, 16, 16, 128>}, {pipeline_mode = #tpu.pipeline_mode<synchronous>, transform_indices = @transform_1, window_bounds = array<i64: 128, 32>}, {pipeline_mode = #tpu.pipeline_mode<synchronous>, transform_indices = @transform_2, window_bounds = array<i64: 1, 32>}, {pipeline_mode = #tpu.pipeline_mode<synchronous>, transform_indices = @transform_3, window_bounds = array<i64: 1, 32>}, {pipeline_mode = #tpu.pipeline_mode<synchronous>, transform_indices = @transform_4, window_bounds = array<i64: 288, 32>}, {pipeline_mode = #tpu.pipeline_mode<synchronous>, transform_indices = @transform_5, window_bounds = array<i64: 1, 32>}, {pipeline_mode = #tpu.pipeline_mode<synchronous>, transform_indices = @transform_6, window_bounds = array<i64: 1, 32>}, {pipeline_mode = #tpu.pipeline_mode<synchronous>, transform_indices = @transform_7, window_bounds = array<i64: 32, 128>}, {pipeline_mode = #tpu.pipeline_mode<synchronous>, transform_indices = @transform_8, window_bounds = array<i64: 1, 128>}, {pipeline_mode = #tpu.pipeline_mode<synchronous>, transform_indices = @transform_9, window_bounds = array<i64: 1, 128>}, {transform_indices = @transform_10, window_bounds = array<i64: 1, 16, 16, 128>}]} {
    %c0 = arith.constant 0 : index
    %c0_0 = arith.constant 0 : index
    %c0_1 = arith.constant 0 : index
    %c0_2 = arith.constant 0 : index
    %0 = vector.load %arg1[%c0, %c0_0, %c0_1, %c0_2] : memref<1x16x16x128xf32, #tpu.memory_space<vmem>>, vector<1x16x16x128xf32>
    %1 = vector.shape_cast %0 : vector<1x16x16x128xf32> to vector<16x16x128xf32>
    %2 = vector.shape_cast %1 : vector<16x16x128xf32> to vector<256x128xf32>
    %3 = arith.truncf %2 : vector<256x128xf32> to vector<256x128xbf16>
    %c0_3 = arith.constant 0 : index
    %c0_4 = arith.constant 0 : index
    %4 = vector.load %arg2[%c0_3, %c0_4] : memref<128x32xbf16, #tpu.memory_space<vmem>>, vector<128x32xbf16>
    %cst = arith.constant dense<0.000000e+00> : vector<256x32xf32>
    %5 = tpu.matmul %3, %4, %cst {dimension_numbers = #tpu.dot_dimension_numbers<[1], [0], [0], [1], [0, 0, 1, 1], [], []>} : vector<256x128xbf16>, vector<128x32xbf16>, vector<256x32xf32> -> vector<256x32xf32>
    %c0_5 = arith.constant 0 : index
    %c0_6 = arith.constant 0 : index
    %6 = vector.load %arg3[%c0_5, %c0_6] : memref<1x32xf32, #tpu.memory_space<vmem>>, vector<1x32xf32>
    %7 = vector.broadcast %6 : vector<1x32xf32> to vector<256x32xf32>
    %8 = arith.mulf %5, %7 : vector<256x32xf32>
    %c0_7 = arith.constant 0 : index
    %c0_8 = arith.constant 0 : index
    %9 = vector.load %arg4[%c0_7, %c0_8] : memref<1x32xf32, #tpu.memory_space<vmem>>, vector<1x32xf32>
    %10 = vector.broadcast %9 : vector<1x32xf32> to vector<256x32xf32>
    %11 = arith.addf %8, %10 : vector<256x32xf32>
    %cst_9 = arith.constant 0.000000e+00 : f32
    %12 = vector.broadcast %cst_9 : f32 to vector<256x32xf32>
    %13 = arith.maximumf %11, %12 : vector<256x32xf32>
    %14 = arith.truncf %13 : vector<256x32xf32> to vector<256x32xbf16>
    %15 = vector.shape_cast %14 : vector<256x32xbf16> to vector<16x16x32xbf16>
    %cst_10 = arith.constant 0.000000e+00 : bf16
    %16 = vector.broadcast %cst_10 : bf16 to vector<1x16x32xbf16>
    %cst_11 = arith.constant 0.000000e+00 : bf16
    %17 = vector.broadcast %cst_11 : bf16 to vector<18x1x32xbf16>
    %18 = tpu.concatenate %16, %15, %16 in 0 : vector<1x16x32xbf16>, vector<16x16x32xbf16>, vector<1x16x32xbf16> -> vector<18x16x32xbf16>
    %19 = tpu.concatenate %17, %18, %17 in 1 : vector<18x1x32xbf16>, vector<18x16x32xbf16>, vector<18x1x32xbf16> -> vector<18x18x32xbf16>
    %20 = vector.extract_strided_slice %19 {offsets = [0, 0, 0], sizes = [18, 16, 32], strides = [1, 1, 1]} : vector<18x18x32xbf16> to vector<18x16x32xbf16>
    %21 = vector.extract_strided_slice %19 {offsets = [0, 1, 0], sizes = [18, 16, 32], strides = [1, 1, 1]} : vector<18x18x32xbf16> to vector<18x16x32xbf16>
    %22 = vector.extract_strided_slice %19 {offsets = [0, 2, 0], sizes = [18, 16, 32], strides = [1, 1, 1]} : vector<18x18x32xbf16> to vector<18x16x32xbf16>
    %23 = tpu.concatenate %20, %21, %22 in 2 : vector<18x16x32xbf16>, vector<18x16x32xbf16>, vector<18x16x32xbf16> -> vector<18x16x96xbf16>
    %24 = vector.extract_strided_slice %23 {offsets = [0, 0, 0], sizes = [16, 16, 96], strides = [1, 1, 1]} : vector<18x16x96xbf16> to vector<16x16x96xbf16>
    %25 = vector.extract_strided_slice %23 {offsets = [1, 0, 0], sizes = [16, 16, 96], strides = [1, 1, 1]} : vector<18x16x96xbf16> to vector<16x16x96xbf16>
    %26 = vector.extract_strided_slice %23 {offsets = [2, 0, 0], sizes = [16, 16, 96], strides = [1, 1, 1]} : vector<18x16x96xbf16> to vector<16x16x96xbf16>
    %27 = tpu.concatenate %24, %25, %26 in 2 : vector<16x16x96xbf16>, vector<16x16x96xbf16>, vector<16x16x96xbf16> -> vector<16x16x288xbf16>
    %28 = vector.shape_cast %27 : vector<16x16x288xbf16> to vector<256x288xbf16>
    %c0_12 = arith.constant 0 : index
    %c0_13 = arith.constant 0 : index
    %29 = vector.load %arg5[%c0_12, %c0_13] : memref<288x32xbf16, #tpu.memory_space<vmem>>, vector<288x32xbf16>
    %cst_14 = arith.constant dense<0.000000e+00> : vector<256x32xf32>
    %30 = tpu.matmul %28, %29, %cst_14 {dimension_numbers = #tpu.dot_dimension_numbers<[1], [0], [0], [1], [0, 0, 1, 1], [], []>} : vector<256x288xbf16>, vector<288x32xbf16>, vector<256x32xf32> -> vector<256x32xf32>
    %c0_15 = arith.constant 0 : index
    %c0_16 = arith.constant 0 : index
    %31 = vector.load %arg6[%c0_15, %c0_16] : memref<1x32xf32, #tpu.memory_space<vmem>>, vector<1x32xf32>
    %32 = vector.broadcast %31 : vector<1x32xf32> to vector<256x32xf32>
    %33 = arith.mulf %30, %32 : vector<256x32xf32>
    %c0_17 = arith.constant 0 : index
    %c0_18 = arith.constant 0 : index
    %34 = vector.load %arg7[%c0_17, %c0_18] : memref<1x32xf32, #tpu.memory_space<vmem>>, vector<1x32xf32>
    %35 = vector.broadcast %34 : vector<1x32xf32> to vector<256x32xf32>
    %36 = arith.addf %33, %35 : vector<256x32xf32>
    %cst_19 = arith.constant 0.000000e+00 : f32
    %37 = vector.broadcast %cst_19 : f32 to vector<256x32xf32>
    %38 = arith.maximumf %36, %37 : vector<256x32xf32>
    %39 = arith.truncf %38 : vector<256x32xf32> to vector<256x32xbf16>
    %c0_20 = arith.constant 0 : index
    %c0_21 = arith.constant 0 : index
    %40 = vector.load %arg8[%c0_20, %c0_21] : memref<32x128xbf16, #tpu.memory_space<vmem>>, vector<32x128xbf16>
    %cst_22 = arith.constant dense<0.000000e+00> : vector<256x128xf32>
    %41 = tpu.matmul %39, %40, %cst_22 {dimension_numbers = #tpu.dot_dimension_numbers<[1], [0], [0], [1], [0, 0, 1, 1], [], []>} : vector<256x32xbf16>, vector<32x128xbf16>, vector<256x128xf32> -> vector<256x128xf32>
    %c0_23 = arith.constant 0 : index
    %c0_24 = arith.constant 0 : index
    %42 = vector.load %arg9[%c0_23, %c0_24] : memref<1x128xf32, #tpu.memory_space<vmem>>, vector<1x128xf32>
    %43 = vector.broadcast %42 : vector<1x128xf32> to vector<256x128xf32>
    %44 = arith.mulf %41, %43 : vector<256x128xf32>
    %c0_25 = arith.constant 0 : index
    %c0_26 = arith.constant 0 : index
    %45 = vector.load %arg10[%c0_25, %c0_26] : memref<1x128xf32, #tpu.memory_space<vmem>>, vector<1x128xf32>
    %46 = vector.broadcast %45 : vector<1x128xf32> to vector<256x128xf32>
    %47 = arith.addf %44, %46 : vector<256x128xf32>
    %48 = arith.addf %47, %2 : vector<256x128xf32>
    %cst_27 = arith.constant 0.000000e+00 : f32
    %49 = vector.broadcast %cst_27 : f32 to vector<256x128xf32>
    %50 = arith.maximumf %48, %49 : vector<256x128xf32>
    %51 = vector.shape_cast %50 : vector<256x128xf32> to vector<16x16x128xf32>
    %c0_28 = arith.constant 0 : index
    %c0_29 = arith.constant 0 : index
    %c0_30 = arith.constant 0 : index
    %c0_31 = arith.constant 0 : index
    %52 = vector.load %arg11[%c0_28, %c0_29, %c0_30, %c0_31] : memref<1x16x16x128xf32, #tpu.memory_space<vmem>>, vector<1x16x16x128xf32>
    %53 = vector.shape_cast %52 : vector<1x16x16x128xf32> to vector<16x16x128xf32>
    %54 = vector.shape_cast %51 : vector<16x16x128xf32> to vector<1x16x16x128xf32>
    tpu.vector_store %arg11[%c0_28, %c0_29, %c0_30, %c0_31], %54 {strides = array<i32>} : memref<1x16x16x128xf32, #tpu.memory_space<vmem>>, vector<1x16x16x128xf32>,
    return
  }
  func.func @transform_0(%arg0: i32) -> (i32, i32, i32, i32) {
    %c0_i32 = arith.constant 0 : i32
    %c0_i32_0 = arith.constant 0 : i32
    %c0_i32_1 = arith.constant 0 : i32
    %c0_i32_2 = arith.constant 0 : i32
    return %arg0, %c0_i32, %c0_i32_0, %c0_i32_1 : i32, i32, i32, i32
  }
  func.func @transform_1(%arg0: i32) -> (i32, i32) {
    %c0_i32 = arith.constant 0 : i32
    %c0_i32_0 = arith.constant 0 : i32
    %c0_i32_1 = arith.constant 0 : i32
    return %c0_i32, %c0_i32_0 : i32, i32
  }
  func.func @transform_2(%arg0: i32) -> (i32, i32) {
    %c0_i32 = arith.constant 0 : i32
    %c0_i32_0 = arith.constant 0 : i32
    %c0_i32_1 = arith.constant 0 : i32
    return %c0_i32, %c0_i32_0 : i32, i32
  }
  func.func @transform_3(%arg0: i32) -> (i32, i32) {
    %c0_i32 = arith.constant 0 : i32
    %c0_i32_0 = arith.constant 0 : i32
    %c0_i32_1 = arith.constant 0 : i32
    return %c0_i32, %c0_i32_0 : i32, i32
  }
  func.func @transform_4(%arg0: i32) -> (i32, i32) {
    %c0_i32 = arith.constant 0 : i32
    %c0_i32_0 = arith.constant 0 : i32
    %c0_i32_1 = arith.constant 0 : i32
    return %c0_i32, %c0_i32_0 : i32, i32
  }
  func.func @transform_5(%arg0: i32) -> (i32, i32) {
    %c0_i32 = arith.constant 0 : i32
    %c0_i32_0 = arith.constant 0 : i32
    %c0_i32_1 = arith.constant 0 : i32
    return %c0_i32, %c0_i32_0 : i32, i32
  }
  func.func @transform_6(%arg0: i32) -> (i32, i32) {
    %c0_i32 = arith.constant 0 : i32
    %c0_i32_0 = arith.constant 0 : i32
    %c0_i32_1 = arith.constant 0 : i32
    return %c0_i32, %c0_i32_0 : i32, i32
  }
  func.func @transform_7(%arg0: i32) -> (i32, i32) {
    %c0_i32 = arith.constant 0 : i32
    %c0_i32_0 = arith.constant 0 : i32
    %c0_i32_1 = arith.constant 0 : i32
    return %c0_i32, %c0_i32_0 : i32, i32
  }
  func.func @transform_8(%arg0: i32) -> (i32, i32) {
    %c0_i32 = arith.constant 0 : i32
    %c0_i32_0 = arith.constant 0 : i32
    %c0_i32_1 = arith.constant 0 : i32
    return %c0_i32, %c0_i32_0 : i32, i32
  }
  func.func @transform_9(%arg0: i32) -> (i32, i32) {
    %c0_i32 = arith.constant 0 : i32
    %c0_i32_0 = arith.constant 0 : i32
    %c0_i32_1 = arith.constant 0 : i32
    return %c0_i32, %c0_i32_0 : i32, i32
  }
  func.func @transform_10(%arg0: i32) -> (i32, i32, i32, i32) {
    %c0_i32 = arith.constant 0 : i32
    %c0_i32_0 = arith.constant 0 : i32
    %c0_i32_1 = arith.constant 0 : i32
    %c0_i32_2 = arith.constant 0 : i32
    return %arg0, %c0_i32, %c0_i32_0, %c0_i32_1 : i32, i32, i32, i32
  }
}

</mosaic_0001>

<llo_original>
// kernel: bottleneck_forward.1
$region0: #{bottleneck_forward.1}
  #allocation0 [shape = 'u32[]', space=smem, size = 0x4, offset = 0x4, fixed_abs, tag = 'smem constant byte address 0x4 - core index']
  #allocation1 [shape = 'u32[144,128]{1,0:T(1,128)}', space=vmem, size = 0x12000, scoped, tag = 'internal scratch']
  %s0 = inlined_call_operand.hbm [shape: f32[2,16,16,128], index: 0, kind: input, shape index: {}]
  %s1 = inlined_call_operand.vmem [shape: bf16[128,32], index: 1, kind: input, shape index: {}]
  %s2 = inlined_call_operand.vmem [shape: f32[1,32], index: 2, kind: input, shape index: {}]
  %s3 = inlined_call_operand.vmem [shape: f32[1,32], index: 3, kind: input, shape index: {}]
  %s4 = inlined_call_operand.hbm [shape: bf16[288,32], index: 4, kind: input, shape index: {}]
  %s5 = inlined_call_operand.vmem [shape: f32[1,32], index: 5, kind: input, shape index: {}]
  %s6 = inlined_call_operand.vmem [shape: f32[1,32], index: 6, kind: input, shape index: {}]
  %s7 = inlined_call_operand.vmem [shape: bf16[32,128], index: 7, kind: input, shape index: {}]
  %s8 = inlined_call_operand.vmem [shape: f32[1,128], index: 8, kind: input, shape index: {}]
  %s9 = inlined_call_operand.vmem [shape: f32[1,128], index: 9, kind: input, shape index: {}]
  %s10 = inlined_call_operand.hbm [shape: f32[2,16,16,128], index: 10, kind: output, shape index: {}]
  %s11 = sld [smem:[#allocation0]]
  $region81: #{bottleneck_forward.1} parent=0
    _
  %s13 = ssub.s32 1, %s11
  %s14 = scalar_select 0, %s13, %s11
  $region1: #{bottleneck_forward.1} parent=0
    #allocation2 [shape = 'u8[262144]{0}', space=vmem, size = 0x40000, scoped, tag = 'input window, operand 0']
    #allocation3 [shape = 's32[2]{0}', space=sflag, size = 0x8, scoped, tag = 'scoped memory for bottleneck_forward.1']
    #allocation4 [shape = 's32[2]{0}', space=sflag, size = 0x8, scoped, tag = 'scoped memory for bottleneck_forward.1']
    #allocation5 [shape = 'u8[73728]{0}', space=vmem, size = 0x12000, scoped, tag = 'input window, operand 4, single buffered']
    #allocation6 [shape = 's32[1]{0}', space=sflag, size = 0x4, scoped, tag = 'scoped memory for bottleneck_forward.1']
    #allocation7 [shape = 'u8[262144]{0}', space=vmem, size = 0x40000, scoped, tag = 'output window, operand 0']
    %15 = vsyncpa [#allocation3], 0
    %s16 = scalar_lea.sflag [#allocation3], 1
    %17 = vsyncpa %s16, 0
    %18 = vsyncpa [#allocation6], 0
    %19 = vsyncpa [#allocation4], 0
    %s20 = scalar_lea.sflag [#allocation4], 1
    %21 = vsyncpa %s20, 0
    loop: start=0, step=1, limit=4
    $region2: #{bottleneck_forward.1} parent=1 // loop_pre_header
      _
    $region3: #{bottleneck_forward.1} parent=1 // loop_header
      %s23 = sphi 0, %s27
      %p24 = scmp.ge.s32.totalorder %s23, 4
      %s33 = sphi 0, %s35
      %s36 = sphi 0, %s33
      %s37 = sphi 0, %s36
      %s53 = sphi 0, %s37
      %s57 = sphi 0, %s57
      %s59 = sphi 0, %s57
      %s60 = sphi 0, %s59
      %s74 = sphi 0, %s60
      %s78 = sphi 0, %s78
      %s80 = sphi 0, %s78
      %s81 = sphi 0, %s80
      %s95 = sphi 0, %s81
      %s99 = sphi 0, %s99
      %s101 = sphi 0, %s99
      %s102 = sphi 0, %s101
      %s116 = sphi 0, %s102
      %s120 = sphi 0, %s120
      %s122 = sphi 0, %s120
      %s123 = sphi 0, %s122
      %s137 = sphi 0, %s123
      %s141 = sphi 0, %s141
      %s143 = sphi 0, %s141
      %s144 = sphi 0, %s143
      %s158 = sphi 0, %s144
      %s162 = sphi 0, %s162
      %s164 = sphi 0, %s162
      %s165 = sphi 0, %s164
      %s179 = sphi 0, %s165
      %s183 = sphi 0, %s183
      %s185 = sphi 0, %s183
      %s186 = sphi 0, %s185
      %s200 = sphi 0, %s186
      %s204 = sphi 0, %s204
      %s206 = sphi 0, %s204
      %s207 = sphi 0, %s206
      %s221 = sphi 0, %s207
      %s225 = sphi 0, %s225
      %s227 = sphi 0, %s225
      %s228 = sphi 0, %s227
      %s242 = sphi 0, %s228
      %s248 = sphi 0, %s250
      %s251 = sphi 0, %s248
      %s252 = sphi 0, %s251
      %s268 = sphi 0, %s252
    $region4: #{bottleneck_forward.1} parent=1 // loop_header_branch
      %26 = sbr.rel (%p24) target = $region8
    $region5: #{bottleneck_forward.1} parent=1 // loop_body
      %s28 = ssub.s32 %s23, 1
      %s29 = ssub.s32 %s23, 2
      %s30 = sadd.s32 %s23, 1
      %s31 = ssub.s32 %s23, %s30
      %p32 = scmp.eq.s32.totalorder %s31, 0
      %s34 = sadd.s32 %s33, 1
      %s35 = scalar_select %p32, %s33, %s34
      %p38 = pneg %p32
      %p39 = scmp.eq.s32.totalorder %s23, 1
      %p40 = por %p38, %p39
      %p41 = scmp.ne.s32.totalorder %s33, %s36
      %p42 = scmp.eq.s32.totalorder %s23, 0
      %p43 = por %p41, %p42
      %p44 = scmp.ne.s32.totalorder %s33, %s36
      %p45 = scmp.eq.s32.totalorder %s28, 1
      %p46 = por %p44, %p45
      %p47 = scmp.ne.s32.totalorder %s36, %s37
      %p48 = scmp.eq.s32.totalorder %s28, 0
      %p49 = por %p47, %p48
      %p50 = scmp.ne.s32.totalorder %s36, %s37
      %p51 = scmp.eq.s32.totalorder %s29, 1
      %p52 = por %p50, %p51
      %p54 = scmp.ne.s32.totalorder %s37, %s53
      %p55 = scmp.eq.s32.totalorder %s29, 0
      %p56 = por %p54, %p55
      %s58 = sadd.s32 %s57, 1
      %p61 = scmp.eq.s32.totalorder %s23, 1
      %p62 = scmp.ne.s32.totalorder %s57, %s59
      %p63 = scmp.eq.s32.totalorder %s23, 0
      %p64 = por %p62, %p63
      %p65 = scmp.ne.s32.totalorder %s57, %s59
      %p66 = scmp.eq.s32.totalorder %s28, 1
      %p67 = por %p65, %p66
      %p68 = scmp.ne.s32.totalorder %s59, %s60
      %p69 = scmp.eq.s32.totalorder %s28, 0
      %p70 = por %p68, %p69
      %p71 = scmp.ne.s32.totalorder %s59, %s60
      %p72 = scmp.eq.s32.totalorder %s29, 1
      %p73 = por %p71, %p72
      %p75 = scmp.ne.s32.totalorder %s60, %s74
      %p76 = scmp.eq.s32.totalorder %s29, 0
      %p77 = por %p75, %p76
      %s79 = sadd.s32 %s78, 1
      %p82 = scmp.eq.s32.totalorder %s23, 1
      %p83 = scmp.ne.s32.totalorder %s78, %s80
      %p84 = scmp.eq.s32.totalorder %s23, 0
      %p85 = por %p83, %p84
      %p86 = scmp.ne.s32.totalorder %s78, %s80
      %p87 = scmp.eq.s32.totalorder %s28, 1
      %p88 = por %p86, %p87
      %p89 = scmp.ne.s32.totalorder %s80, %s81
      %p90 = scmp.eq.s32.totalorder %s28, 0
      %p91 = por %p89, %p90
      %p92 = scmp.ne.s32.totalorder %s80, %s81
      %p93 = scmp.eq.s32.totalorder %s29, 1
      %p94 = por %p92, %p93
      %p96 = scmp.ne.s32.totalorder %s81, %s95
      %p97 = scmp.eq.s32.totalorder %s29, 0
      %p98 = por %p96, %p97
      %s100 = sadd.s32 %s99, 1
      %p103 = scmp.eq.s32.totalorder %s23, 1
      %p104 = scmp.ne.s32.totalorder %s99, %s101
      %p105 = scmp.eq.s32.totalorder %s23, 0
      %p106 = por %p104, %p105
      %p107 = scmp.ne.s32.totalorder %s99, %s101
      %p108 = scmp.eq.s32.totalorder %s28, 1
      %p109 = por %p107, %p108
      %p110 = scmp.ne.s32.totalorder %s101, %s102
      %p111 = scmp.eq.s32.totalorder %s28, 0
      %p112 = por %p110, %p111
      %p113 = scmp.ne.s32.totalorder %s101, %s102
      %p114 = scmp.eq.s32.totalorder %s29, 1
      %p115 = por %p113, %p114
      %p117 = scmp.ne.s32.totalorder %s102, %s116
      %p118 = scmp.eq.s32.totalorder %s29, 0
      %p119 = por %p117, %p118
      %s121 = sadd.s32 %s120, 1
      %p124 = scmp.eq.s32.totalorder %s23, 1
      %p125 = scmp.ne.s32.totalorder %s120, %s122
      %p126 = scmp.eq.s32.totalorder %s23, 0
      %p127 = por %p125, %p126
      %p128 = scmp.ne.s32.totalorder %s120, %s122
      %p129 = scmp.eq.s32.totalorder %s28, 1
      %p130 = por %p128, %p129
      %p131 = scmp.ne.s32.totalorder %s122, %s123
      %p132 = scmp.eq.s32.totalorder %s28, 0
      %p133 = por %p131, %p132
      %p134 = scmp.ne.s32.totalorder %s122, %s123
      %p135 = scmp.eq.s32.totalorder %s29, 1
      %p136 = por %p134, %p135
      %p138 = scmp.ne.s32.totalorder %s123, %s137
      %p139 = scmp.eq.s32.totalorder %s29, 0
      %p140 = por %p138, %p139
      %s142 = sadd.s32 %s141, 1
      %p145 = scmp.eq.s32.totalorder %s23, 1
      %p146 = scmp.ne.s32.totalorder %s141, %s143
      %p147 = scmp.eq.s32.totalorder %s23, 0
      %p148 = por %p146, %p147
      %p149 = scmp.ne.s32.totalorder %s141, %s143
      %p150 = scmp.eq.s32.totalorder %s28, 1
      %p151 = por %p149, %p150
      %p152 = scmp.ne.s32.totalorder %s143, %s144
      %p153 = scmp.eq.s32.totalorder %s28, 0
      %p154 = por %p152, %p153
      %p155 = scmp.ne.s32.totalorder %s143, %s144
      %p156 = scmp.eq.s32.totalorder %s29, 1
      %p157 = por %p155, %p156
      %p159 = scmp.ne.s32.totalorder %s144, %s158
      %p160 = scmp.eq.s32.totalorder %s29, 0
      %p161 = por %p159, %p160
      %s163 = sadd.s32 %s162, 1
      %p166 = scmp.eq.s32.totalorder %s23, 1
      %p167 = scmp.ne.s32.totalorder %s162, %s164
      %p168 = scmp.eq.s32.totalorder %s23, 0
      %p169 = por %p167, %p168
      %p170 = scmp.ne.s32.totalorder %s162, %s164
      %p171 = scmp.eq.s32.totalorder %s28, 1
      %p172 = por %p170, %p171
      %p173 = scmp.ne.s32.totalorder %s164, %s165
      %p174 = scmp.eq.s32.totalorder %s28, 0
      %p175 = por %p173, %p174
      %p176 = scmp.ne.s32.totalorder %s164, %s165
      %p177 = scmp.eq.s32.totalorder %s29, 1
      %p178 = por %p176, %p177
      %p180 = scmp.ne.s32.totalorder %s165, %s179
      %p181 = scmp.eq.s32.totalorder %s29, 0
      %p182 = por %p180, %p181
      %s184 = sadd.s32 %s183, 1
      %p187 = scmp.eq.s32.totalorder %s23, 1
      %p188 = scmp.ne.s32.totalorder %s183, %s185
      %p189 = scmp.eq.s32.totalorder %s23, 0
      %p190 = por %p188, %p189
      %p191 = scmp.ne.s32.totalorder %s183, %s185
      %p192 = scmp.eq.s32.totalorder %s28, 1
      %p193 = por %p191, %p192
      %p194 = scmp.ne.s32.totalorder %s185, %s186
      %p195 = scmp.eq.s32.totalorder %s28, 0
      %p196 = por %p194, %p195
      %p197 = scmp.ne.s32.totalorder %s185, %s186
      %p198 = scmp.eq.s32.totalorder %s29, 1
      %p199 = por %p197, %p198
      %p201 = scmp.ne.s32.totalorder %s186, %s200
      %p202 = scmp.eq.s32.totalorder %s29, 0
      %p203 = por %p201, %p202
      %s205 = sadd.s32 %s204, 1
      %p208 = scmp.eq.s32.totalorder %s23, 1
      %p209 = scmp.ne.s32.totalorder %s204, %s206
      %p210 = scmp.eq.s32.totalorder %s23, 0
      %p211 = por %p209, %p210
      %p212 = scmp.ne.s32.totalorder %s204, %s206
      %p213 = scmp.eq.s32.totalorder %s28, 1
      %p214 = por %p212, %p213
      %p215 = scmp.ne.s32.totalorder %s206, %s207
      %p216 = scmp.eq.s32.totalorder %s28, 0
      %p217 = por %p215, %p216
      %p218 = scmp.ne.s32.totalorder %s206, %s207
      %p219 = scmp.eq.s32.totalorder %s29, 1
      %p220 = por %p218, %p219
      %p222 = scmp.ne.s32.totalorder %s207, %s221
      %p223 = scmp.eq.s32.totalorder %s29, 0
      %p224 = por %p222, %p223
      %s226 = sadd.s32 %s225, 1
      %p229 = scmp.eq.s32.totalorder %s23, 1
      %p230 = scmp.ne.s32.totalorder %s225, %s227
      %p231 = scmp.eq.s32.totalorder %s23, 0
      %p232 = por %p230, %p231
      %p233 = scmp.ne.s32.totalorder %s225, %s227
      %p234 = scmp.eq.s32.totalorder %s28, 1
      %p235 = por %p233, %p234
      %p236 = scmp.ne.s32.totalorder %s227, %s228
      %p237 = scmp.eq.s32.totalorder %s28, 0
      %p238 = por %p236, %p237
      %p239 = scmp.ne.s32.totalorder %s227, %s228
      %p240 = scmp.eq.s32.totalorder %s29, 1
      %p241 = por %p239, %p240
      %p243 = scmp.ne.s32.totalorder %s228, %s242
      %p244 = scmp.eq.s32.totalorder %s29, 0
      %p245 = por %p243, %p244
      %s246 = ssub.s32 %s23, %s30
      %p247 = scmp.eq.s32.totalorder %s246, 0
      %s249 = sadd.s32 %s248, 1
      %s250 = scalar_select %p247, %s248, %s249
      %p253 = pneg %p247
      %p254 = scmp.eq.s32.totalorder %s23, 1
      %p255 = por %p253, %p254
      %p256 = scmp.ne.s32.totalorder %s248, %s251
      %p257 = scmp.eq.s32.totalorder %s23, 0
      %p258 = por %p256, %p257
      %p259 = scmp.ne.s32.totalorder %s248, %s251
      %p260 = scmp.eq.s32.totalorder %s28, 1
      %p261 = por %p259, %p260
      %p262 = scmp.ne.s32.totalorder %s251, %s252
      %p263 = scmp.eq.s32.totalorder %s28, 0
      %p264 = por %p262, %p263
      %p265 = scmp.ne.s32.totalorder %s251, %s252
      %p266 = scmp.eq.s32.totalorder %s29, 1
      %p267 = por %p265, %p266
      %p269 = scmp.ne.s32.totalorder %s252, %s268
      %p270 = scmp.eq.s32.totalorder %s29, 0
      %p271 = por %p269, %p270
      %p272 = scmp.le.s32.totalorder 1, %s23
      %p273 = scmp.lt.s32.totalorder %s23, 3
      %p274 = pnand %p272, %p273
      %p275 = pneg %p274
      // Predicated region
      $region9: #{bottleneck_forward.1} parent=5 // pred_check
        _
      $region10: #{bottleneck_forward.1} parent=5 // pred_check_branch
        %277 = sbr.rel (%p274) target = $region12
      $region11: #{bottleneck_forward.1} parent=5 // pred_region
        %s278 = ssub.s32 %s23, 1
        // Predicated region
        $region13: #{bottleneck_forward.1} parent=11 // pred_check
          %p279 = pneg %p70
        $region14: #{bottleneck_forward.1} parent=11 // pred_check_branch
          %281 = sbr.rel (%p279) target = $region16
        $region15: #{bottleneck_forward.1} parent=11 // pred_region
          _
        $region16: #{bottleneck_forward.1} parent=11 // pred_fallthru
          _
        // Predicated region
        $region17: #{bottleneck_forward.1} parent=11 // pred_check
          %p282 = pneg %p91
        $region18: #{bottleneck_forward.1} parent=11 // pred_check_branch
          %284 = sbr.rel (%p282) target = $region20
        $region19: #{bottleneck_forward.1} parent=11 // pred_region
          _
        $region20: #{bottleneck_forward.1} parent=11 // pred_fallthru
          _
        // Predicated region
        $region21: #{bottleneck_forward.1} parent=11 // pred_check
          %p285 = pneg %p112
        $region22: #{bottleneck_forward.1} parent=11 // pred_check_branch
          %287 = sbr.rel (%p285) target = $region24
        $region23: #{bottleneck_forward.1} parent=11 // pred_region
          _
        $region24: #{bottleneck_forward.1} parent=11 // pred_fallthru
          _
        // Predicated region
        $region25: #{bottleneck_forward.1} parent=11 // pred_check
          %p288 = pneg %p133
        $region26: #{bottleneck_forward.1} parent=11 // pred_check_branch
          %290 = sbr.rel (%p288) target = $region28
        $region27: #{bottleneck_forward.1} parent=11 // pred_region
          %s292 = ssub.s32 2304, 2304
          %293 = vsyncadd [#allocation6], %s292
          %s294 = sshll.u32 [#allocation5], 4
          %s295 = int_to_ptr.vmem [resolvable:$true] %s294
          %300 = dma.hbm_to_vmem [thread:$0]  %s4, 2304, %s295, [#allocation6], 64, 64, 4
        $region28: #{bottleneck_forward.1} parent=11 // pred_fallthru
          _
        // Predicated region
        $region29: #{bottleneck_forward.1} parent=11 // pred_check
          %p301 = pneg %p154
        $region30: #{bottleneck_forward.1} parent=11 // pred_check_branch
          %303 = sbr.rel (%p301) target = $region32
        $region31: #{bottleneck_forward.1} parent=11 // pred_region
          _
        $region32: #{bottleneck_forward.1} parent=11 // pred_fallthru
          _
        // Predicated region
        $region33: #{bottleneck_forward.1} parent=11 // pred_check
          %p304 = pneg %p175
        $region34: #{bottleneck_forward.1} parent=11 // pred_check_branch
          %306 = sbr.rel (%p304) target = $region36
        $region35: #{bottleneck_forward.1} parent=11 // pred_region
          _
        $region36: #{bottleneck_forward.1} parent=11 // pred_fallthru
          _
        // Predicated region
        $region37: #{bottleneck_forward.1} parent=11 // pred_check
          %p307 = pneg %p196
        $region38: #{bottleneck_forward.1} parent=11 // pred_check_branch
          %309 = sbr.rel (%p307) target = $region40
        $region39: #{bottleneck_forward.1} parent=11 // pred_region
          _
        $region40: #{bottleneck_forward.1} parent=11 // pred_fallthru
          _
        // Predicated region
        $region41: #{bottleneck_forward.1} parent=11 // pred_check
          %p310 = pneg %p217
        $region42: #{bottleneck_forward.1} parent=11 // pred_check_branch
          %312 = sbr.rel (%p310) target = $region44
        $region43: #{bottleneck_forward.1} parent=11 // pred_region
          _
        $region44: #{bottleneck_forward.1} parent=11 // pred_fallthru
          _
        // Predicated region
        $region45: #{bottleneck_forward.1} parent=11 // pred_check
          %p313 = pneg %p238
        $region46: #{bottleneck_forward.1} parent=11 // pred_check_branch
          %315 = sbr.rel (%p313) target = $region48
        $region47: #{bottleneck_forward.1} parent=11 // pred_region
          _
        $region48: #{bottleneck_forward.1} parent=11 // pred_fallthru
          _
      $region12: #{bottleneck_forward.1} parent=5 // pred_fallthru
        _
      %p316 = scmp.lt.s32.totalorder %s23, 2
      // Predicated region
      $region49: #{bottleneck_forward.1} parent=5 // pred_check
        %p317 = pneg %p316
      $region50: #{bottleneck_forward.1} parent=5 // pred_check_branch
        %319 = sbr.rel (%p317) target = $region52
      $region51: #{bottleneck_forward.1} parent=5 // pred_region
        // Predicated region
        $region53: #{bottleneck_forward.1} parent=51 // pred_check
          %p320 = pneg %p43
        $region54: #{bottleneck_forward.1} parent=51 // pred_check_branch
          %322 = sbr.rel (%p320) target = $region56
        $region55: #{bottleneck_forward.1} parent=51 // pred_region
          %s323 = sand.u32 %s33, 1
          %s324 = scalar_lea.sflag [#allocation3], %s323
          %s325 = sand.u32 %s33, 1
          %s326 = smul.addr %s325, 256
          %s327 = scalar_lea.vmem [#allocation2], %s326
          %s329 = ssub.s32 4096, 4096
          %330 = vsyncadd %s324, %s329
          %s331 = smul.addr %s23, 32
          %s332 = smul.addr %s331, 128
          %s333 = scalar_lea.hbm %s0, %s332
          %s334 = sshll.u32 %s327, 4
          %s335 = int_to_ptr.vmem [resolvable:$true] %s334
          %340 = dma.hbm_to_vmem [thread:$0]  %s333, 4096, %s335, %s324, 128, 128, 8
        $region56: #{bottleneck_forward.1} parent=51 // pred_fallthru
          _
      $region52: #{bottleneck_forward.1} parent=5 // pred_fallthru
        _
      %p341 = scmp.le.s32.totalorder 1, %s23
      %p342 = scmp.lt.s32.totalorder %s23, 3
      %p343 = pnand %p341, %p342
      %p344 = pneg %p343
      // Predicated region
      $region57: #{bottleneck_forward.1} parent=5 // pred_check
        _
      $region58: #{bottleneck_forward.1} parent=5 // pred_check_branch
        %346 = sbr.rel (%p343) target = $region60
      $region59: #{bottleneck_forward.1} parent=5 // pred_region
        %s347 = ssub.s32 %s23, 1
        %s348 = sand.u32 %s36, 1
        %s349 = scalar_lea.sflag [#allocation3], %s348
        %s350 = sand.u32 %s36, 1
        %s351 = smul.addr %s350, 256
        %s352 = scalar_lea.vmem [#allocation2], %s351
        // Predicated region
        $region61: #{bottleneck_forward.1} parent=59 // pred_check
          %p353 = pneg %p49
        $region62: #{bottleneck_forward.1} parent=59 // pred_check_branch
          %355 = sbr.rel (%p353) target = $region64
        $region63: #{bottleneck_forward.1} parent=59 // pred_region
          %356 = dma.done %s349, 4096
        $region64: #{bottleneck_forward.1} parent=59 // pred_fallthru
          _
        // Predicated region
        $region65: #{bottleneck_forward.1} parent=59 // pred_check
          %p357 = pneg %p133
        $region66: #{bottleneck_forward.1} parent=59 // pred_check_branch
          %359 = sbr.rel (%p357) target = $region68
        $region67: #{bottleneck_forward.1} parent=59 // pred_region
          %360 = dma.done [#allocation6], 2304
        $region68: #{bottleneck_forward.1} parent=59 // pred_fallthru
          _
        %s361 = sand.u32 %s36, 1
        %s362 = scalar_lea.sflag [#allocation3], %s361
        %s363 = sand.u32 %s36, 1
        %s364 = smul.addr %s363, 256
        %s365 = scalar_lea.vmem [#allocation2], %s364
        %p366 = pneg %p49
        %p367 = pneg %p46
        %p368 = pneg %p70
        %p369 = pneg %p67
        %p370 = pneg %p91
        %p371 = pneg %p88
        %p372 = pneg %p112
        %p373 = pneg %p109
        %p374 = pneg %p133
        %p375 = pneg %p130
        %p376 = pneg %p154
        %p377 = pneg %p151
        %p378 = pneg %p175
        %p379 = pneg %p172
        %p380 = pneg %p196
        %p381 = pneg %p193
        %p382 = pneg %p217
        %p383 = pneg %p214
        %p384 = pneg %p238
        %p385 = pneg %p235
        %p386 = pneg %p264
        %p387 = pneg %p261
        %s388 = sand.u32 %s251, 1
        %s389 = scalar_lea.sflag [#allocation4], %s388
        %s390 = sand.u32 %s251, 1
        %s391 = smul.addr %s390, 256
        %s392 = scalar_lea.vmem [#allocation7], %s391
        %v394 = vld [vmem:[%s352] sm:$0xff]
        %v395 = vld [vmem:[%s352 + $0x8] sm:$0xff]
        %v396 = vld [vmem:[%s352 + $0x10] sm:$0xff]
        %v397 = vld [vmem:[%s352 + $0x18] sm:$0xff]
        %v398 = vld [vmem:[%s352 + $0x20] sm:$0xff]
        %v399 = vld [vmem:[%s352 + $0x28] sm:$0xff]
        %v400 = vld [vmem:[%s352 + $0x30] sm:$0xff]
        %v401 = vld [vmem:[%s352 + $0x38] sm:$0xff]
        %v402 = vld [vmem:[%s352 + $0x40] sm:$0xff]
        %v403 = vld [vmem:[%s352 + $0x48] sm:$0xff]
        %v404 = vld [vmem:[%s352 + $0x50] sm:$0xff]
        %v405 = vld [vmem:[%s352 + $0x58] sm:$0xff]
        %v406 = vld [vmem:[%s352 + $0x60] sm:$0xff]
        %v407 = vld [vmem:[%s352 + $0x68] sm:$0xff]
        %v408 = vld [vmem:[%s352 + $0x70] sm:$0xff]
        %v409 = vld [vmem:[%s352 + $0x78] sm:$0xff]
        %v410 = vld [vmem:[%s352 + $0x80] sm:$0xff]
        %v411 = vld [vmem:[%s352 + $0x88] sm:$0xff]
        %v412 = vld [vmem:[%s352 + $0x90] sm:$0xff]
        %v413 = vld [vmem:[%s352 + $0x98] sm:$0xff]
        %v414 = vld [vmem:[%s352 + $0xa0] sm:$0xff]
        %v415 = vld [vmem:[%s352 + $0xa8] sm:$0xff]
        %v416 = vld [vmem:[%s352 + $0xb0] sm:$0xff]
        %v417 = vld [vmem:[%s352 + $0xb8] sm:$0xff]
        %v418 = vld [vmem:[%s352 + $0xc0] sm:$0xff]
        %v419 = vld [vmem:[%s352 + $0xc8] sm:$0xff]
        %v420 = vld [vmem:[%s352 + $0xd0] sm:$0xff]
        %v421 = vld [vmem:[%s352 + $0xd8] sm:$0xff]
        %v422 = vld [vmem:[%s352 + $0xe0] sm:$0xff]
        %v423 = vld [vmem:[%s352 + $0xe8] sm:$0xff]
        %v424 = vld [vmem:[%s352 + $0xf0] sm:$0xff]
        %v425 = vld [vmem:[%s352 + $0xf8] sm:$0xff]
        %v426 = vpack.c.bf16 %v395, %v394
        %v427 = vpack.c.bf16 %v397, %v396
        %v428 = vpack.c.bf16 %v399, %v398
        %v429 = vpack.c.bf16 %v401, %v400
        %v430 = vpack.c.bf16 %v403, %v402
        %v431 = vpack.c.bf16 %v405, %v404
        %v432 = vpack.c.bf16 %v407, %v406
        %v433 = vpack.c.bf16 %v409, %v408
        %v434 = vpack.c.bf16 %v411, %v410
        %v435 = vpack.c.bf16 %v413, %v412
        %v436 = vpack.c.bf16 %v415, %v414
        %v437 = vpack.c.bf16 %v417, %v416
        %v438 = vpack.c.bf16 %v419, %v418
        %v439 = vpack.c.bf16 %v421, %v420
        %v440 = vpack.c.bf16 %v423, %v422
        %v441 = vpack.c.bf16 %v425, %v424
        %v442 = vld [vmem:[%s1] sm:$0xf]
        %v443 = vld [vmem:[%s1 + $0x4] sm:$0xf]
        %v444 = vld [vmem:[%s1 + $0x8] sm:$0xf]
        %v445 = vld [vmem:[%s1 + $0xc] sm:$0xf]
        %v446 = vld [vmem:[%s1 + $0x10] sm:$0xf]
        %v447 = vld [vmem:[%s1 + $0x14] sm:$0xf]
        %v448 = vld [vmem:[%s1 + $0x18] sm:$0xf]
        %v449 = vld [vmem:[%s1 + $0x1c] sm:$0xf]
        %v450 = vld [vmem:[%s1 + $0x20] sm:$0xf]
        %v451 = vld [vmem:[%s1 + $0x24] sm:$0xf]
        %v452 = vld [vmem:[%s1 + $0x28] sm:$0xf]
        %v453 = vld [vmem:[%s1 + $0x2c] sm:$0xf]
        %v454 = vld [vmem:[%s1 + $0x30] sm:$0xf]
        %v455 = vld [vmem:[%s1 + $0x34] sm:$0xf]
        %v456 = vld [vmem:[%s1 + $0x38] sm:$0xf]
        %v457 = vld [vmem:[%s1 + $0x3c] sm:$0xf]
        %v474 = vunpack.c.l.b16 %v442
        %v475 = vunpack.c.l.b16 %v443
        %v476 = vunpack.c.l.b16 %v444
        %v477 = vunpack.c.l.b16 %v445
        %v478 = vunpack.c.l.b16 %v446
        %v479 = vunpack.c.l.b16 %v447
        %v480 = vunpack.c.l.b16 %v448
        %v481 = vunpack.c.l.b16 %v449
        %v482 = vunpack.c.l.b16 %v450
        %v483 = vunpack.c.l.b16 %v451
        %v484 = vunpack.c.l.b16 %v452
        %v485 = vunpack.c.l.b16 %v453
        %v486 = vunpack.c.l.b16 %v454
        %v487 = vunpack.c.l.b16 %v455
        %v488 = vunpack.c.l.b16 %v456
        %v489 = vunpack.c.l.b16 %v457
        %v490 = vpack.c.b16 %v475, %v474
        %v491 = vpack.c.b16 %v477, %v476
        %v492 = vpack.c.b16 %v479, %v478
        %v493 = vpack.c.b16 %v481, %v480
        %v494 = vpack.c.b16 %v483, %v482
        %v495 = vpack.c.b16 %v485, %v484
        %v496 = vpack.c.b16 %v487, %v486
        %v497 = vpack.c.b16 %v489, %v488
        %506 = vmatprep.subr.bf16.mxu0 0
        %507 = vmatpush1.bf16.msra.mxu0 %v490
        %508 = vmatprep.subr.bf16.mxu0 0
        %509 = vmatpush1.bf16.msra.mxu0 %v491
        %510 = vmatprep.subr.bf16.mxu0 0
        %511 = vmatpush1.bf16.msra.mxu0 %v492
        %512 = vmatprep.subr.bf16.mxu0 0
        %513 = vmatpush1.bf16.msra.mxu0 %v493
        %514 = vmatprep.subr.bf16.mxu0 0
        %515 = vmatpush1.bf16.msra.mxu0 %v494
        %516 = vmatprep.subr.bf16.mxu0 0
        %517 = vmatpush1.bf16.msra.mxu0 %v495
        %518 = vmatprep.subr.bf16.mxu0 0
        %519 = vmatpush1.bf16.msra.mxu0 %v496
        %520 = vmatprep.subr.bf16.mxu0 0
        %521 = vmatpush1.bf16.msra.mxu0 %v497
        %522 = vmatprep.subr.bf16.mxu0 0
        %523 = vmatpush1.bf16.msra.mxu0 0
        %524 = vmatprep.subr.bf16.mxu0 0
        %525 = vmatpush1.bf16.msra.mxu0 0
        %526 = vmatprep.subr.bf16.mxu0 0
        %527 = vmatpush1.bf16.msra.mxu0 0
        %528 = vmatprep.subr.bf16.mxu0 0
        %529 = vmatpush1.bf16.msra.mxu0 0
        %530 = vmatprep.subr.bf16.mxu0 0
        %531 = vmatpush1.bf16.msra.mxu0 0
        %532 = vmatprep.subr.bf16.mxu0 0
        %533 = vmatpush1.bf16.msra.mxu0 0
        %534 = vmatprep.subr.bf16.mxu0 0
        %535 = vmatpush1.bf16.msra.mxu0 0
        %536 = vmatprep.subr.bf16.mxu0 0
        %537 = vmatpush1.bf16.msra.mxu0 0
        %538 = vmatprep.mubr.bf16.mxu0 0
        %539 = vmatmul.mubr.bf16.gmra.mrb[0].mxu0 %v426
        %v540 = vpop.f32.mrb[0].mxu0
        %v541 = vadd.f32 0.0, %v540
        %v542 = vpop.f32.mrb[0].mxu0
        %v543 = vpop.f32.mrb[0].mxu0
        %v544 = vadd.f32 0.0, %v543
        %v545 = vpop.f32.mrb[0].mxu0
        %546 = vmatprep.mubr.bf16.mxu0 0
        %547 = vmatmul.mubr.bf16.gmra.mrb[0].mxu0 %v427
        %v548 = vpop.f32.mrb[0].mxu0
        %v549 = vadd.f32 0.0, %v548
        %v550 = vpop.f32.mrb[0].mxu0
        %v551 = vpop.f32.mrb[0].mxu0
        %v552 = vadd.f32 0.0, %v551
        %v553 = vpop.f32.mrb[0].mxu0
        %554 = vmatprep.mubr.bf16.mxu0 0
        %555 = vmatmul.mubr.bf16.gmra.mrb[0].mxu0 %v428
        %v556 = vpop.f32.mrb[0].mxu0
        %v557 = vadd.f32 0.0, %v556
        %v558 = vpop.f32.mrb[0].mxu0
        %v559 = vpop.f32.mrb[0].mxu0
        %v560 = vadd.f32 0.0, %v559
        %v561 = vpop.f32.mrb[0].mxu0
        %562 = vmatprep.mubr.bf16.mxu0 0
        %563 = vmatmul.mubr.bf16.gmra.mrb[0].mxu0 %v429
        %v564 = vpop.f32.mrb[0].mxu0
        %v565 = vadd.f32 0.0, %v564
        %v566 = vpop.f32.mrb[0].mxu0
        %v567 = vpop.f32.mrb[0].mxu0
        %v568 = vadd.f32 0.0, %v567
        %v569 = vpop.f32.mrb[0].mxu0
        %570 = vmatprep.mubr.bf16.mxu0 0
        %571 = vmatmul.mubr.bf16.gmra.mrb[0].mxu0 %v430
        %v572 = vpop.f32.mrb[0].mxu0
        %v573 = vadd.f32 0.0, %v572
        %v574 = vpop.f32.mrb[0].mxu0
        %v575 = vpop.f32.mrb[0].mxu0
        %v576 = vadd.f32 0.0, %v575
        %v577 = vpop.f32.mrb[0].mxu0
        %578 = vmatprep.mubr.bf16.mxu0 0
        %579 = vmatmul.mubr.bf16.gmra.mrb[0].mxu0 %v431
        %v580 = vpop.f32.mrb[0].mxu0
        %v581 = vadd.f32 0.0, %v580
        %v582 = vpop.f32.mrb[0].mxu0
        %v583 = vpop.f32.mrb[0].mxu0
        %v584 = vadd.f32 0.0, %v583
        %v585 = vpop.f32.mrb[0].mxu0
        %586 = vmatprep.mubr.bf16.mxu0 0
        %587 = vmatmul.mubr.bf16.gmra.mrb[0].mxu0 %v432
        %v588 = vpop.f32.mrb[0].mxu0
        %v589 = vadd.f32 0.0, %v588
        %v590 = vpop.f32.mrb[0].mxu0
        %v591 = vpop.f32.mrb[0].mxu0
        %v592 = vadd.f32 0.0, %v591
        %v593 = vpop.f32.mrb[0].mxu0
        %594 = vmatprep.mubr.bf16.mxu0 0
        %595 = vmatmul.mubr.bf16.gmra.mrb[0].mxu0 %v433
        %v596 = vpop.f32.mrb[0].mxu0
        %v597 = vadd.f32 0.0, %v596
        %v598 = vpop.f32.mrb[0].mxu0
        %v599 = vpop.f32.mrb[0].mxu0
        %v600 = vadd.f32 0.0, %v599
        %v601 = vpop.f32.mrb[0].mxu0
        %602 = vmatprep.mubr.bf16.mxu0 0
        %603 = vmatmul.mubr.bf16.gmra.mrb[0].mxu0 %v434
        %v604 = vpop.f32.mrb[0].mxu0
        %v605 = vadd.f32 0.0, %v604
        %v606 = vpop.f32.mrb[0].mxu0
        %v607 = vpop.f32.mrb[0].mxu0
        %v608 = vadd.f32 0.0, %v607
        %v609 = vpop.f32.mrb[0].mxu0
        %610 = vmatprep.mubr.bf16.mxu0 0
        %611 = vmatmul.mubr.bf16.gmra.mrb[0].mxu0 %v435
        %v612 = vpop.f32.mrb[0].mxu0
        %v613 = vadd.f32 0.0, %v612
        %v614 = vpop.f32.mrb[0].mxu0
        %v615 = vpop.f32.mrb[0].mxu0
        %v616 = vadd.f32 0.0, %v615
        %v617 = vpop.f32.mrb[0].mxu0
        %618 = vmatprep.mubr.bf16.mxu0 0
        %619 = vmatmul.mubr.bf16.gmra.mrb[0].mxu0 %v436
        %v620 = vpop.f32.mrb[0].mxu0
        %v621 = vadd.f32 0.0, %v620
        %v622 = vpop.f32.mrb[0].mxu0
        %v623 = vpop.f32.mrb[0].mxu0
        %v624 = vadd.f32 0.0, %v623
        %v625 = vpop.f32.mrb[0].mxu0
        %626 = vmatprep.mubr.bf16.mxu0 0
        %627 = vmatmul.mubr.bf16.gmra.mrb[0].mxu0 %v437
        %v628 = vpop.f32.mrb[0].mxu0
        %v629 = vadd.f32 0.0, %v628
        %v630 = vpop.f32.mrb[0].mxu0
        %v631 = vpop.f32.mrb[0].mxu0
        %v632 = vadd.f32 0.0, %v631
        %v633 = vpop.f32.mrb[0].mxu0
        %634 = vmatprep.mubr.bf16.mxu0 0
        %635 = vmatmul.mubr.bf16.gmra.mrb[0].mxu0 %v438
        %v636 = vpop.f32.mrb[0].mxu0
        %v637 = vadd.f32 0.0, %v636
        %v638 = vpop.f32.mrb[0].mxu0
        %v639 = vpop.f32.mrb[0].mxu0
        %v640 = vadd.f32 0.0, %v639
        %v641 = vpop.f32.mrb[0].mxu0
        %642 = vmatprep.mubr.bf16.mxu0 0
        %643 = vmatmul.mubr.bf16.gmra.mrb[0].mxu0 %v439
        %v644 = vpop.f32.mrb[0].mxu0
        %v645 = vadd.f32 0.0, %v644
        %v646 = vpop.f32.mrb[0].mxu0
        %v647 = vpop.f32.mrb[0].mxu0
        %v648 = vadd.f32 0.0, %v647
        %v649 = vpop.f32.mrb[0].mxu0
        %650 = vmatprep.mubr.bf16.mxu0 0
        %651 = vmatmul.mubr.bf16.gmra.mrb[0].mxu0 %v440
        %v652 = vpop.f32.mrb[0].mxu0
        %v653 = vadd.f32 0.0, %v652
        %v654 = vpop.f32.mrb[0].mxu0
        %v655 = vpop.f32.mrb[0].mxu0
        %v656 = vadd.f32 0.0, %v655
        %v657 = vpop.f32.mrb[0].mxu0
        %658 = vmatprep.mubr.bf16.mxu0 0
        %659 = vmatmul.mubr.bf16.gmra.mrb[0].mxu0 %v441
        %v660 = vpop.f32.mrb[0].mxu0
        %v661 = vadd.f32 0.0, %v660
        %v662 = vpop.f32.mrb[0].mxu0
        %v663 = vpop.f32.mrb[0].mxu0
        %v664 = vadd.f32 0.0, %v663
        %v665 = vpop.f32.mrb[0].mxu0
        %666 = vdwg.mxu0
        %v667 = vld [vmem:[%s2] sm:$0x1]
        %v669 = vlaneseq
        %v670 = vshrl.u32 %v669, 7
        %v671 = vsub.s32 0, %v670
        %v672 = vrot.slane %v667, %v671
        %v674 = vmul.f32 %v541, %v672
        %v675 = vmul.f32 %v544, %v672
        %v676 = vmul.f32 %v549, %v672
        %v677 = vmul.f32 %v552, %v672
        %v678 = vmul.f32 %v557, %v672
        %v679 = vmul.f32 %v560, %v672
        %v680 = vmul.f32 %v565, %v672
        %v681 = vmul.f32 %v568, %v672
        %v682 = vmul.f32 %v573, %v672
        %v683 = vmul.f32 %v576, %v672
        %v684 = vmul.f32 %v581, %v672
        %v685 = vmul.f32 %v584, %v672
        %v686 = vmul.f32 %v589, %v672
        %v687 = vmul.f32 %v592, %v672
        %v688 = vmul.f32 %v597, %v672
        %v689 = vmul.f32 %v600, %v672
        %v690 = vmul.f32 %v605, %v672
        %v691 = vmul.f32 %v608, %v672
        %v692 = vmul.f32 %v613, %v672
        %v693 = vmul.f32 %v616, %v672
        %v694 = vmul.f32 %v621, %v672
        %v695 = vmul.f32 %v624, %v672
        %v696 = vmul.f32 %v629, %v672
        %v697 = vmul.f32 %v632, %v672
        %v698 = vmul.f32 %v637, %v672
        %v699 = vmul.f32 %v640, %v672
        %v700 = vmul.f32 %v645, %v672
        %v701 = vmul.f32 %v648, %v672
        %v702 = vmul.f32 %v653, %v672
        %v703 = vmul.f32 %v656, %v672
        %v704 = vmul.f32 %v661, %v672
        %v705 = vmul.f32 %v664, %v672
        %v706 = vld [vmem:[%s3] sm:$0x1]
        %v708 = vlaneseq
        %v709 = vshrl.u32 %v708, 7
        %v710 = vsub.s32 0, %v709
        %v711 = vrot.slane %v706, %v710
        %v713 = vadd.f32 %v674, %v711
        %v714 = vadd.f32 %v675, %v711
        %v715 = vadd.f32 %v676, %v711
        %v716 = vadd.f32 %v677, %v711
        %v717 = vadd.f32 %v678, %v711
        %v718 = vadd.f32 %v679, %v711
        %v719 = vadd.f32 %v680, %v711
        %v720 = vadd.f32 %v681, %v711
        %v721 = vadd.f32 %v682, %v711
        %v722 = vadd.f32 %v683, %v711
        %v723 = vadd.f32 %v684, %v711
        %v724 = vadd.f32 %v685, %v711
        %v725 = vadd.f32 %v686, %v711
        %v726 = vadd.f32 %v687, %v711
        %v727 = vadd.f32 %v688, %v711
        %v728 = vadd.f32 %v689, %v711
        %v729 = vadd.f32 %v690, %v711
        %v730 = vadd.f32 %v691, %v711
        %v731 = vadd.f32 %v692, %v711
        %v732 = vadd.f32 %v693, %v711
        %v733 = vadd.f32 %v694, %v711
        %v734 = vadd.f32 %v695, %v711
        %v735 = vadd.f32 %v696, %v711
        %v736 = vadd.f32 %v697, %v711
        %v737 = vadd.f32 %v698, %v711
        %v738 = vadd.f32 %v699, %v711
        %v739 = vadd.f32 %v700, %v711
        %v740 = vadd.f32 %v701, %v711
        %v741 = vadd.f32 %v702, %v711
        %v742 = vadd.f32 %v703, %v711
        %v743 = vadd.f32 %v704, %v711
        %v744 = vadd.f32 %v705, %v711
        %v745 = vmax.f32 %v713, 0.0
        %v746 = vmax.f32 %v714, 0.0
        %v747 = vmax.f32 %v715, 0.0
        %v748 = vmax.f32 %v716, 0.0
        %v749 = vmax.f32 %v717, 0.0
        %v750 = vmax.f32 %v718, 0.0
        %v751 = vmax.f32 %v719, 0.0
        %v752 = vmax.f32 %v720, 0.0
        %v753 = vmax.f32 %v721, 0.0
        %v754 = vmax.f32 %v722, 0.0
        %v755 = vmax.f32 %v723, 0.0
        %v756 = vmax.f32 %v724, 0.0
        %v757 = vmax.f32 %v725, 0.0
        %v758 = vmax.f32 %v726, 0.0
        %v759 = vmax.f32 %v727, 0.0
        %v760 = vmax.f32 %v728, 0.0
        %v761 = vmax.f32 %v729, 0.0
        %v762 = vmax.f32 %v730, 0.0
        %v763 = vmax.f32 %v731, 0.0
        %v764 = vmax.f32 %v732, 0.0
        %v765 = vmax.f32 %v733, 0.0
        %v766 = vmax.f32 %v734, 0.0
        %v767 = vmax.f32 %v735, 0.0
        %v768 = vmax.f32 %v736, 0.0
        %v769 = vmax.f32 %v737, 0.0
        %v770 = vmax.f32 %v738, 0.0
        %v771 = vmax.f32 %v739, 0.0
        %v772 = vmax.f32 %v740, 0.0
        %v773 = vmax.f32 %v741, 0.0
        %v774 = vmax.f32 %v742, 0.0
        %v775 = vmax.f32 %v743, 0.0
        %v776 = vmax.f32 %v744, 0.0
        %v777 = vpack.c.bf16 %v746, %v745
        %v778 = vpack.c.bf16 %v748, %v747
        %v779 = vpack.c.bf16 %v750, %v749
        %v780 = vpack.c.bf16 %v752, %v751
        %v781 = vpack.c.bf16 %v754, %v753
        %v782 = vpack.c.bf16 %v756, %v755
        %v783 = vpack.c.bf16 %v758, %v757
        %v784 = vpack.c.bf16 %v760, %v759
        %v785 = vpack.c.bf16 %v762, %v761
        %v786 = vpack.c.bf16 %v764, %v763
        %v787 = vpack.c.bf16 %v766, %v765
        %v788 = vpack.c.bf16 %v768, %v767
        %v789 = vpack.c.bf16 %v770, %v769
        %v790 = vpack.c.bf16 %v772, %v771
        %v791 = vpack.c.bf16 %v774, %v773
        %v792 = vpack.c.bf16 %v776, %v775
        %v794 = vshrl.u32 0, 16
        %v796 = vrot.slane %v794, 7
        %v797 = vshll.u32 0, 16
        %v799 = vor.u32 %v796, %v797
        %v801 = vshrl.u32 %v777, 16
        %v803 = vrot.slane %v801, 7
        %v804 = vshll.u32 %v777, 16
        %v806 = vor.u32 %v803, %v804
        %v808 = vshrl.u32 %v778, 16
        %v810 = vrot.slane %v808, 7
        %v811 = vshll.u32 %v778, 16
        %v813 = vor.u32 %v810, %v811
        %v815 = vshrl.u32 %v779, 16
        %v817 = vrot.slane %v815, 7
        %v818 = vshll.u32 %v779, 16
        %v820 = vor.u32 %v817, %v818
        %v822 = vshrl.u32 %v780, 16
        %v824 = vrot.slane %v822, 7
        %v825 = vshll.u32 %v780, 16
        %v827 = vor.u32 %v824, %v825
        %v829 = vshrl.u32 %v781, 16
        %v831 = vrot.slane %v829, 7
        %v832 = vshll.u32 %v781, 16
        %v834 = vor.u32 %v831, %v832
        %v836 = vshrl.u32 %v782, 16
        %v838 = vrot.slane %v836, 7
        %v839 = vshll.u32 %v782, 16
        %v841 = vor.u32 %v838, %v839
        %v843 = vshrl.u32 %v783, 16
        %v845 = vrot.slane %v843, 7
        %v846 = vshll.u32 %v783, 16
        %v848 = vor.u32 %v845, %v846
        %v850 = vshrl.u32 %v784, 16
        %v852 = vrot.slane %v850, 7
        %v853 = vshll.u32 %v784, 16
        %v855 = vor.u32 %v852, %v853
        %v857 = vshrl.u32 %v785, 16
        %v859 = vrot.slane %v857, 7
        %v860 = vshll.u32 %v785, 16
        %v862 = vor.u32 %v859, %v860
        %v864 = vshrl.u32 %v786, 16
        %v866 = vrot.slane %v864, 7
        %v867 = vshll.u32 %v786, 16
        %v869 = vor.u32 %v866, %v867
        %v871 = vshrl.u32 %v787, 16
        %v873 = vrot.slane %v871, 7
        %v874 = vshll.u32 %v787, 16
        %v876 = vor.u32 %v873, %v874
        %v878 = vshrl.u32 %v788, 16
        %v880 = vrot.slane %v878, 7
        %v881 = vshll.u32 %v788, 16
        %v883 = vor.u32 %v880, %v881
        %v885 = vshrl.u32 %v789, 16
        %v887 = vrot.slane %v885, 7
        %v888 = vshll.u32 %v789, 16
        %v890 = vor.u32 %v887, %v888
        %v892 = vshrl.u32 %v790, 16
        %v894 = vrot.slane %v892, 7
        %v895 = vshll.u32 %v790, 16
        %v897 = vor.u32 %v894, %v895
        %v899 = vshrl.u32 %v791, 16
        %v901 = vrot.slane %v899, 7
        %v902 = vshll.u32 %v791, 16
        %v904 = vor.u32 %v901, %v902
        %v906 = vshrl.u32 %v792, 16
        %v908 = vrot.slane %v906, 7
        %v909 = vshll.u32 %v792, 16
        %v911 = vor.u32 %v908, %v909
        %vm946 = vcmask 1040384
        %vm947 = vsmask.f32 256
        %vm948 = vmand %vm946, %vm947
        %v949 = vsel %vm948, 0, %v799
        %v950 = vsel %vm948, 0, %v806
        %v951 = vsel %vm948, 0, %v813
        %v952 = vsel %vm948, 0, %v820
        %v953 = vsel %vm948, 0, %v827
        %v954 = vsel %vm948, 0, %v834
        %v955 = vsel %vm948, 0, %v841
        %v956 = vsel %vm948, 0, %v848
        %v957 = vsel %vm948, 0, %v855
        %v958 = vsel %vm948, 0, %v862
        %v959 = vsel %vm948, 0, %v869
        %v960 = vsel %vm948, 0, %v876
        %v961 = vsel %vm948, 0, %v883
        %v962 = vsel %vm948, 0, %v890
        %v963 = vsel %vm948, 0, %v897
        %v964 = vsel %vm948, 0, %v904
        %v965 = vsel %vm948, 0, %v911
        %v966 = vsel %vm948, %v796, 0
        %v967 = vsel %vm948, %v803, 0
        %v968 = vsel %vm948, %v810, 0
        %v969 = vsel %vm948, %v817, 0
        %v970 = vsel %vm948, %v824, 0
        %v971 = vsel %vm948, %v831, 0
        %v972 = vsel %vm948, %v838, 0
        %v973 = vsel %vm948, %v845, 0
        %v974 = vsel %vm948, %v852, 0
        %v975 = vsel %vm948, %v859, 0
        %v976 = vsel %vm948, %v866, 0
        %v977 = vsel %vm948, %v873, 0
        %v978 = vsel %vm948, %v880, 0
        %v979 = vsel %vm948, %v887, 0
        %v980 = vsel %vm948, %v894, 0
        %v981 = vsel %vm948, %v901, 0
        %v982 = vsel %vm948, %v908, 0
        %vm983 = vsmask.f32 7424
        %v985 = vshrl.u32 %v949, 16
        %v987 = vshll.u32 %v949, 16
        %v989 = vrot.slane %v987, 1
        %v990 = vor.u32 %v985, %v989
        %v992 = vshll.u32 %v966, 16
        %v994 = vrot.slane %v992, 1
        %v995 = vsel %vm983, %v990, %v994
        %v997 = vshrl.u32 %v950, 16
        %v999 = vshll.u32 %v950, 16
        %v1001 = vrot.slane %v999, 1
        %v1002 = vor.u32 %v997, %v1001
        %v1004 = vshll.u32 %v967, 16
        %v1006 = vrot.slane %v1004, 1
        %v1007 = vsel %vm983, %v1002, %v1006
        %v1009 = vshrl.u32 %v951, 16
        %v1011 = vshll.u32 %v951, 16
        %v1013 = vrot.slane %v1011, 1
        %v1014 = vor.u32 %v1009, %v1013
        %v1016 = vshll.u32 %v968, 16
        %v1018 = vrot.slane %v1016, 1
        %v1019 = vsel %vm983, %v1014, %v1018
        %v1021 = vshrl.u32 %v952, 16
        %v1023 = vshll.u32 %v952, 16
        %v1025 = vrot.slane %v1023, 1
        %v1026 = vor.u32 %v1021, %v1025
        %v1028 = vshll.u32 %v969, 16
        %v1030 = vrot.slane %v1028, 1
        %v1031 = vsel %vm983, %v1026, %v1030
        %v1033 = vshrl.u32 %v953, 16
        %v1035 = vshll.u32 %v953, 16
        %v1037 = vrot.slane %v1035, 1
        %v1038 = vor.u32 %v1033, %v1037
        %v1040 = vshll.u32 %v970, 16
        %v1042 = vrot.slane %v1040, 1
        %v1043 = vsel %vm983, %v1038, %v1042
        %v1045 = vshrl.u32 %v954, 16
        %v1047 = vshll.u32 %v954, 16
        %v1049 = vrot.slane %v1047, 1
        %v1050 = vor.u32 %v1045, %v1049
        %v1052 = vshll.u32 %v971, 16
        %v1054 = vrot.slane %v1052, 1
        %v1055 = vsel %vm983, %v1050, %v1054
        %v1057 = vshrl.u32 %v955, 16
        %v1059 = vshll.u32 %v955, 16
        %v1061 = vrot.slane %v1059, 1
        %v1062 = vor.u32 %v1057, %v1061
        %v1064 = vshll.u32 %v972, 16
        %v1066 = vrot.slane %v1064, 1
        %v1067 = vsel %vm983, %v1062, %v1066
        %v1069 = vshrl.u32 %v956, 16
        %v1071 = vshll.u32 %v956, 16
        %v1073 = vrot.slane %v1071, 1
        %v1074 = vor.u32 %v1069, %v1073
        %v1076 = vshll.u32 %v973, 16
        %v1078 = vrot.slane %v1076, 1
        %v1079 = vsel %vm983, %v1074, %v1078
        %v1081 = vshrl.u32 %v957, 16
        %v1083 = vshll.u32 %v957, 16
        %v1085 = vrot.slane %v1083, 1
        %v1086 = vor.u32 %v1081, %v1085
        %v1088 = vshll.u32 %v974, 16
        %v1090 = vrot.slane %v1088, 1
        %v1091 = vsel %vm983, %v1086, %v1090
        %v1093 = vshrl.u32 %v958, 16
        %v1095 = vshll.u32 %v958, 16
        %v1097 = vrot.slane %v1095, 1
        %v1098 = vor.u32 %v1093, %v1097
        %v1100 = vshll.u32 %v975, 16
        %v1102 = vrot.slane %v1100, 1
        %v1103 = vsel %vm983, %v1098, %v1102
        %v1105 = vshrl.u32 %v959, 16
        %v1107 = vshll.u32 %v959, 16
        %v1109 = vrot.slane %v1107, 1
        %v1110 = vor.u32 %v1105, %v1109
        %v1112 = vshll.u32 %v976, 16
        %v1114 = vrot.slane %v1112, 1
        %v1115 = vsel %vm983, %v1110, %v1114
        %v1117 = vshrl.u32 %v960, 16
        %v1119 = vshll.u32 %v960, 16
        %v1121 = vrot.slane %v1119, 1
        %v1122 = vor.u32 %v1117, %v1121
        %v1124 = vshll.u32 %v977, 16
        %v1126 = vrot.slane %v1124, 1
        %v1127 = vsel %vm983, %v1122, %v1126
        %v1129 = vshrl.u32 %v961, 16
        %v1131 = vshll.u32 %v961, 16
        %v1133 = vrot.slane %v1131, 1
        %v1134 = vor.u32 %v1129, %v1133
        %v1136 = vshll.u32 %v978, 16
        %v1138 = vrot.slane %v1136, 1
        %v1139 = vsel %vm983, %v1134, %v1138
        %v1141 = vshrl.u32 %v962, 16
        %v1143 = vshll.u32 %v962, 16
        %v1145 = vrot.slane %v1143, 1
        %v1146 = vor.u32 %v1141, %v1145
        %v1148 = vshll.u32 %v979, 16
        %v1150 = vrot.slane %v1148, 1
        %v1151 = vsel %vm983, %v1146, %v1150
        %v1153 = vshrl.u32 %v963, 16
        %v1155 = vshll.u32 %v963, 16
        %v1157 = vrot.slane %v1155, 1
        %v1158 = vor.u32 %v1153, %v1157
        %v1160 = vshll.u32 %v980, 16
        %v1162 = vrot.slane %v1160, 1
        %v1163 = vsel %vm983, %v1158, %v1162
        %v1165 = vshrl.u32 %v964, 16
        %v1167 = vshll.u32 %v964, 16
        %v1169 = vrot.slane %v1167, 1
        %v1170 = vor.u32 %v1165, %v1169
        %v1172 = vshll.u32 %v981, 16
        %v1174 = vrot.slane %v1172, 1
        %v1175 = vsel %vm983, %v1170, %v1174
        %v1177 = vshrl.u32 %v965, 16
        %v1179 = vshll.u32 %v965, 16
        %v1181 = vrot.slane %v1179, 1
        %v1182 = vor.u32 %v1177, %v1181
        %v1184 = vshll.u32 %v982, 16
        %v1186 = vrot.slane %v1184, 1
        %v1187 = vsel %vm983, %v1182, %v1186
        %1188 = vrot.lane.b32.xlu0 %v995, 32
        %v1189 = vpop.permute.xlu0 %1188
        %1190 = vrot.lane.b32.xlu0 %v1007, 32
        %v1191 = vpop.permute.xlu0 %1190
        %1192 = vrot.lane.b32.xlu0 %v1019, 32
        %v1193 = vpop.permute.xlu0 %1192
        %1194 = vrot.lane.b32.xlu0 %v1031, 32
        %v1195 = vpop.permute.xlu0 %1194
        %1196 = vrot.lane.b32.xlu0 %v1043, 32
        %v1197 = vpop.permute.xlu0 %1196
        %1198 = vrot.lane.b32.xlu0 %v1055, 32
        %v1199 = vpop.permute.xlu0 %1198
        %1200 = vrot.lane.b32.xlu0 %v1067, 32
        %v1201 = vpop.permute.xlu0 %1200
        %1202 = vrot.lane.b32.xlu0 %v1079, 32
        %v1203 = vpop.permute.xlu0 %1202
        %1204 = vrot.lane.b32.xlu0 %v1091, 32
        %v1205 = vpop.permute.xlu0 %1204
        %1206 = vrot.lane.b32.xlu0 %v1103, 32
        %v1207 = vpop.permute.xlu0 %1206
        %1208 = vrot.lane.b32.xlu0 %v1115, 32
        %v1209 = vpop.permute.xlu0 %1208
        %1210 = vrot.lane.b32.xlu0 %v1127, 32
        %v1211 = vpop.permute.xlu0 %1210
        %1212 = vrot.lane.b32.xlu0 %v1139, 32
        %v1213 = vpop.permute.xlu0 %1212
        %1214 = vrot.lane.b32.xlu0 %v1151, 32
        %v1215 = vpop.permute.xlu0 %1214
        %1216 = vrot.lane.b32.xlu0 %v1163, 32
        %v1217 = vpop.permute.xlu0 %1216
        %1218 = vrot.lane.b32.xlu0 %v1175, 32
        %v1219 = vpop.permute.xlu0 %1218
        %1220 = vrot.lane.b32.xlu0 %v1187, 32
        %v1221 = vpop.permute.xlu0 %1220
        %vm1256 = vcmask 1046528
        %v1257 = vrot.slane %v949, 1
        %v1258 = vrot.slane %v966, 1
        %v1259 = vsel %vm1256, %v1257, %v1258
        %v1260 = vrot.slane %v950, 1
        %v1261 = vrot.slane %v967, 1
        %v1262 = vsel %vm1256, %v1260, %v1261
        %v1263 = vrot.slane %v951, 1
        %v1264 = vrot.slane %v968, 1
        %v1265 = vsel %vm1256, %v1263, %v1264
        %v1266 = vrot.slane %v952, 1
        %v1267 = vrot.slane %v969, 1
        %v1268 = vsel %vm1256, %v1266, %v1267
        %v1269 = vrot.slane %v953, 1
        %v1270 = vrot.slane %v970, 1
        %v1271 = vsel %vm1256, %v1269, %v1270
        %v1272 = vrot.slane %v954, 1
        %v1273 = vrot.slane %v971, 1
        %v1274 = vsel %vm1256, %v1272, %v1273
        %v1275 = vrot.slane %v955, 1
        %v1276 = vrot.slane %v972, 1
        %v1277 = vsel %vm1256, %v1275, %v1276
        %v1278 = vrot.slane %v956, 1
        %v1279 = vrot.slane %v973, 1
        %v1280 = vsel %vm1256, %v1278, %v1279
        %v1281 = vrot.slane %v957, 1
        %v1282 = vrot.slane %v974, 1
        %v1283 = vsel %vm1256, %v1281, %v1282
        %v1284 = vrot.slane %v958, 1
        %v1285 = vrot.slane %v975, 1
        %v1286 = vsel %vm1256, %v1284, %v1285
        %v1287 = vrot.slane %v959, 1
        %v1288 = vrot.slane %v976, 1
        %v1289 = vsel %vm1256, %v1287, %v1288
        %v1290 = vrot.slane %v960, 1
        %v1291 = vrot.slane %v977, 1
        %v1292 = vsel %vm1256, %v1290, %v1291
        %v1293 = vrot.slane %v961, 1
        %v1294 = vrot.slane %v978, 1
        %v1295 = vsel %vm1256, %v1293, %v1294
        %v1296 = vrot.slane %v962, 1
        %v1297 = vrot.slane %v979, 1
        %v1298 = vsel %vm1256, %v1296, %v1297
        %v1299 = vrot.slane %v963, 1
        %v1300 = vrot.slane %v980, 1
        %v1301 = vsel %vm1256, %v1299, %v1300
        %v1302 = vrot.slane %v964, 1
        %v1303 = vrot.slane %v981, 1
        %v1304 = vsel %vm1256, %v1302, %v1303
        %v1305 = vrot.slane %v965, 1
        %v1306 = vrot.slane %v982, 1
        %v1307 = vsel %vm1256, %v1305, %v1306
        %1308 = vrot.lane.b32.xlu0 %v1259, 64
        %v1309 = vpop.permute.xlu0 %1308
        %1310 = vrot.lane.b32.xlu0 %v1262, 64
        %v1311 = vpop.permute.xlu0 %1310
        %1312 = vrot.lane.b32.xlu0 %v1265, 64
        %v1313 = vpop.permute.xlu0 %1312
        %1314 = vrot.lane.b32.xlu0 %v1268, 64
        %v1315 = vpop.permute.xlu0 %1314
        %1316 = vrot.lane.b32.xlu0 %v1271, 64
        %v1317 = vpop.permute.xlu0 %1316
        %1318 = vrot.lane.b32.xlu0 %v1274, 64
        %v1319 = vpop.permute.xlu0 %1318
        %1320 = vrot.lane.b32.xlu0 %v1277, 64
        %v1321 = vpop.permute.xlu0 %1320
        %1322 = vrot.lane.b32.xlu0 %v1280, 64
        %v1323 = vpop.permute.xlu0 %1322
        %1324 = vrot.lane.b32.xlu0 %v1283, 64
        %v1325 = vpop.permute.xlu0 %1324
        %1326 = vrot.lane.b32.xlu0 %v1286, 64
        %v1327 = vpop.permute.xlu0 %1326
        %1328 = vrot.lane.b32.xlu0 %v1289, 64
        %v1329 = vpop.permute.xlu0 %1328
        %1330 = vrot.lane.b32.xlu0 %v1292, 64
        %v1331 = vpop.permute.xlu0 %1330
        %1332 = vrot.lane.b32.xlu0 %v1295, 64
        %v1333 = vpop.permute.xlu0 %1332
        %1334 = vrot.lane.b32.xlu0 %v1298, 64
        %v1335 = vpop.permute.xlu0 %1334
        %1336 = vrot.lane.b32.xlu0 %v1301, 64
        %v1337 = vpop.permute.xlu0 %1336
        %1338 = vrot.lane.b32.xlu0 %v1304, 64
        %v1339 = vpop.permute.xlu0 %1338
        %1340 = vrot.lane.b32.xlu0 %v1307, 64
        %v1341 = vpop.permute.xlu0 %1340
        %vm1342 = vcmask 261120
        %v1344 = vsel %vm1342, %v949, %v1189
        %v1346 = vsel %vm1342, %v950, %v1191
        %v1348 = vsel %vm1342, %v951, %v1193
        %v1350 = vsel %vm1342, %v952, %v1195
        %v1352 = vsel %vm1342, %v953, %v1197
        %v1354 = vsel %vm1342, %v954, %v1199
        %v1356 = vsel %vm1342, %v955, %v1201
        %v1358 = vsel %vm1342, %v956, %v1203
        %v1360 = vsel %vm1342, %v957, %v1205
        %v1362 = vsel %vm1342, %v958, %v1207
        %v1364 = vsel %vm1342, %v959, %v1209
        %v1366 = vsel %vm1342, %v960, %v1211
        %v1368 = vsel %vm1342, %v961, %v1213
        %v1370 = vsel %vm1342, %v962, %v1215
        %v1372 = vsel %vm1342, %v963, %v1217
        %v1374 = vsel %vm1342, %v964, %v1219
        %v1376 = vsel %vm1342, %v965, %v1221
        %vm1377 = vcmask 523264
        %v1379 = vsel %vm1377, %v1344, %v1309
        %v1381 = vsel %vm1377, %v1346, %v1311
        %v1383 = vsel %vm1377, %v1348, %v1313
        %v1385 = vsel %vm1377, %v1350, %v1315
        %v1387 = vsel %vm1377, %v1352, %v1317
        %v1389 = vsel %vm1377, %v1354, %v1319
        %v1391 = vsel %vm1377, %v1356, %v1321
        %v1393 = vsel %vm1377, %v1358, %v1323
        %v1395 = vsel %vm1377, %v1360, %v1325
        %v1397 = vsel %vm1377, %v1362, %v1327
        %v1399 = vsel %vm1377, %v1364, %v1329
        %v1401 = vsel %vm1377, %v1366, %v1331
        %v1403 = vsel %vm1377, %v1368, %v1333
        %v1405 = vsel %vm1377, %v1370, %v1335
        %v1407 = vsel %vm1377, %v1372, %v1337
        %v1409 = vsel %vm1377, %v1374, %v1339
        %v1411 = vsel %vm1377, %v1376, %v1341
        %1428 = vrot.lane.b32.xlu0 %v1381, 96
        %v1429 = vpop.permute.xlu0 %1428
        %1430 = vrot.lane.b32.xlu0 %v1383, 96
        %v1431 = vpop.permute.xlu0 %1430
        %1432 = vrot.lane.b32.xlu0 %v1385, 96
        %v1433 = vpop.permute.xlu0 %1432
        %1434 = vrot.lane.b32.xlu0 %v1387, 96
        %v1435 = vpop.permute.xlu0 %1434
        %1436 = vrot.lane.b32.xlu0 %v1389, 96
        %v1437 = vpop.permute.xlu0 %1436
        %1438 = vrot.lane.b32.xlu0 %v1391, 96
        %v1439 = vpop.permute.xlu0 %1438
        %1440 = vrot.lane.b32.xlu0 %v1393, 96
        %v1441 = vpop.permute.xlu0 %1440
        %1442 = vrot.lane.b32.xlu0 %v1395, 96
        %v1443 = vpop.permute.xlu0 %1442
        %1444 = vrot.lane.b32.xlu0 %v1397, 96
        %v1445 = vpop.permute.xlu0 %1444
        %1446 = vrot.lane.b32.xlu0 %v1399, 96
        %v1447 = vpop.permute.xlu0 %1446
        %1448 = vrot.lane.b32.xlu0 %v1401, 96
        %v1449 = vpop.permute.xlu0 %1448
        %1450 = vrot.lane.b32.xlu0 %v1403, 96
        %v1451 = vpop.permute.xlu0 %1450
        %1452 = vrot.lane.b32.xlu0 %v1405, 96
        %v1453 = vpop.permute.xlu0 %1452
        %1454 = vrot.lane.b32.xlu0 %v1407, 96
        %v1455 = vpop.permute.xlu0 %1454
        %1456 = vrot.lane.b32.xlu0 %v1409, 96
        %v1457 = vpop.permute.xlu0 %1456
        %1458 = vrot.lane.b32.xlu0 %v1411, 96
        %v1459 = vpop.permute.xlu0 %1458
        %1461 = vrot.lane.b32.xlu0 %v1383, 64
        %v1462 = vpop.permute.xlu0 %1461
        %1463 = vrot.lane.b32.xlu0 %v1385, 64
        %v1464 = vpop.permute.xlu0 %1463
        %1465 = vrot.lane.b32.xlu0 %v1387, 64
        %v1466 = vpop.permute.xlu0 %1465
        %1467 = vrot.lane.b32.xlu0 %v1389, 64
        %v1468 = vpop.permute.xlu0 %1467
        %1469 = vrot.lane.b32.xlu0 %v1391, 64
        %v1470 = vpop.permute.xlu0 %1469
        %1471 = vrot.lane.b32.xlu0 %v1393, 64
        %v1472 = vpop.permute.xlu0 %1471
        %1473 = vrot.lane.b32.xlu0 %v1395, 64
        %v1474 = vpop.permute.xlu0 %1473
        %1475 = vrot.lane.b32.xlu0 %v1397, 64
        %v1476 = vpop.permute.xlu0 %1475
        %1477 = vrot.lane.b32.xlu0 %v1399, 64
        %v1478 = vpop.permute.xlu0 %1477
        %1479 = vrot.lane.b32.xlu0 %v1401, 64
        %v1480 = vpop.permute.xlu0 %1479
        %1481 = vrot.lane.b32.xlu0 %v1403, 64
        %v1482 = vpop.permute.xlu0 %1481
        %1483 = vrot.lane.b32.xlu0 %v1405, 64
        %v1484 = vpop.permute.xlu0 %1483
        %1485 = vrot.lane.b32.xlu0 %v1407, 64
        %v1486 = vpop.permute.xlu0 %1485
        %1487 = vrot.lane.b32.xlu0 %v1409, 64
        %v1488 = vpop.permute.xlu0 %1487
        %1489 = vrot.lane.b32.xlu0 %v1411, 64
        %v1490 = vpop.permute.xlu0 %1489
        %1491 = vrot.lane.b32.xlu0 %v1379, 64
        %v1492 = vpop.permute.xlu0 %1491
        %vm1493 = vcmask 785408
        %v1495 = vsel %vm1493, %v1379, %v1429
        %v1498 = vsel %vm1493, %v1381, %v1431
        %v1501 = vsel %vm1493, %v1383, %v1433
        %v1504 = vsel %vm1493, %v1385, %v1435
        %v1507 = vsel %vm1493, %v1387, %v1437
        %v1510 = vsel %vm1493, %v1389, %v1439
        %v1513 = vsel %vm1493, %v1391, %v1441
        %v1516 = vsel %vm1493, %v1393, %v1443
        %v1519 = vsel %vm1493, %v1395, %v1445
        %v1522 = vsel %vm1493, %v1397, %v1447
        %v1525 = vsel %vm1493, %v1399, %v1449
        %v1528 = vsel %vm1493, %v1401, %v1451
        %v1531 = vsel %vm1493, %v1403, %v1453
        %v1534 = vsel %vm1493, %v1405, %v1455
        %v1537 = vsel %vm1493, %v1407, %v1457
        %v1540 = vsel %vm1493, %v1409, %v1459
        %v1543 = vsel %vm1377, %v1429, %v1462
        %v1546 = vsel %vm1377, %v1431, %v1464
        %v1549 = vsel %vm1377, %v1433, %v1466
        %v1552 = vsel %vm1377, %v1435, %v1468
        %v1555 = vsel %vm1377, %v1437, %v1470
        %v1558 = vsel %vm1377, %v1439, %v1472
        %v1561 = vsel %vm1377, %v1441, %v1474
        %v1564 = vsel %vm1377, %v1443, %v1476
        %v1567 = vsel %vm1377, %v1445, %v1478
        %v1570 = vsel %vm1377, %v1447, %v1480
        %v1573 = vsel %vm1377, %v1449, %v1482
        %v1576 = vsel %vm1377, %v1451, %v1484
        %v1579 = vsel %vm1377, %v1453, %v1486
        %v1582 = vsel %vm1377, %v1455, %v1488
        %v1585 = vsel %vm1377, %v1457, %v1490
        %v1588 = vsel %vm1377, %v1459, %v1492
        %v1590 = vld [vmem:[#allocation5] sm:$0xf]
        %v1591 = vld [vmem:[#allocation5 + $0x4] sm:$0xf]
        %v1592 = vld [vmem:[#allocation5 + $0x8] sm:$0xf]
        %v1593 = vld [vmem:[#allocation5 + $0xc] sm:$0xf]
        %v1594 = vld [vmem:[#allocation5 + $0x10] sm:$0xf]
        %v1595 = vld [vmem:[#allocation5 + $0x14] sm:$0xf]
        %v1596 = vld [vmem:[#allocation5 + $0x18] sm:$0xf]
        %v1597 = vld [vmem:[#allocation5 + $0x1c] sm:$0xf]
        %v1598 = vld [vmem:[#allocation5 + $0x20] sm:$0xf]
        %v1599 = vld [vmem:[#allocation5 + $0x24] sm:$0xf]
        %v1600 = vld [vmem:[#allocation5 + $0x28] sm:$0xf]
        %v1601 = vld [vmem:[#allocation5 + $0x2c] sm:$0xf]
        %v1602 = vld [vmem:[#allocation5 + $0x30] sm:$0xf]
        %v1603 = vld [vmem:[#allocation5 + $0x34] sm:$0xf]
        %v1604 = vld [vmem:[#allocation5 + $0x38] sm:$0xf]
        %v1605 = vld [vmem:[#allocation5 + $0x3c] sm:$0xf]
        %v1606 = vld [vmem:[#allocation5 + $0x40] sm:$0xf]
        %v1607 = vld [vmem:[#allocation5 + $0x44] sm:$0xf]
        %v1608 = vld [vmem:[#allocation5 + $0x48] sm:$0xf]
        %v1609 = vld [vmem:[#allocation5 + $0x4c] sm:$0xf]
        %v1610 = vld [vmem:[#allocation5 + $0x50] sm:$0xf]
        %v1611 = vld [vmem:[#allocation5 + $0x54] sm:$0xf]
        %v1612 = vld [vmem:[#allocation5 + $0x58] sm:$0xf]
        %v1613 = vld [vmem:[#allocation5 + $0x5c] sm:$0xf]
        %v1614 = vld [vmem:[#allocation5 + $0x60] sm:$0xf]
        %v1615 = vld [vmem:[#allocation5 + $0x64] sm:$0xf]
        %v1616 = vld [vmem:[#allocation5 + $0x68] sm:$0xf]
        %v1617 = vld [vmem:[#allocation5 + $0x6c] sm:$0xf]
        %v1618 = vld [vmem:[#allocation5 + $0x70] sm:$0xf]
        %v1619 = vld [vmem:[#allocation5 + $0x74] sm:$0xf]
        %v1620 = vld [vmem:[#allocation5 + $0x78] sm:$0xf]
        %v1621 = vld [vmem:[#allocation5 + $0x7c] sm:$0xf]
        %v1622 = vld [vmem:[#allocation5 + $0x80] sm:$0xf]
        %v1623 = vld [vmem:[#allocation5 + $0x84] sm:$0xf]
        %v1624 = vld [vmem:[#allocation5 + $0x88] sm:$0xf]
        %v1625 = vld [vmem:[#allocation5 + $0x8c] sm:$0xf]
        %v1662 = vunpack.c.l.b16 %v1590
        %v1663 = vunpack.c.l.b16 %v1591
        %v1664 = vunpack.c.l.b16 %v1592
        %v1665 = vunpack.c.l.b16 %v1593
        %v1666 = vunpack.c.l.b16 %v1594
        %v1667 = vunpack.c.l.b16 %v1595
        %v1668 = vunpack.c.l.b16 %v1596
        %v1669 = vunpack.c.l.b16 %v1597
        %v1670 = vunpack.c.l.b16 %v1598
        %v1671 = vunpack.c.l.b16 %v1599
        %v1672 = vunpack.c.l.b16 %v1600
        %v1673 = vunpack.c.l.b16 %v1601
        %v1674 = vunpack.c.l.b16 %v1602
        %v1675 = vunpack.c.l.b16 %v1603
        %v1676 = vunpack.c.l.b16 %v1604
        %v1677 = vunpack.c.l.b16 %v1605
        %v1678 = vunpack.c.l.b16 %v1606
        %v1679 = vunpack.c.l.b16 %v1607
        %v1680 = vunpack.c.l.b16 %v1608
        %v1681 = vunpack.c.l.b16 %v1609
        %v1682 = vunpack.c.l.b16 %v1610
        %v1683 = vunpack.c.l.b16 %v1611
        %v1684 = vunpack.c.l.b16 %v1612
        %v1685 = vunpack.c.l.b16 %v1613
        %v1686 = vunpack.c.l.b16 %v1614
        %v1687 = vunpack.c.l.b16 %v1615
        %v1688 = vunpack.c.l.b16 %v1616
        %v1689 = vunpack.c.l.b16 %v1617
        %v1690 = vunpack.c.l.b16 %v1618
        %v1691 = vunpack.c.l.b16 %v1619
        %v1692 = vunpack.c.l.b16 %v1620
        %v1693 = vunpack.c.l.b16 %v1621
        %v1694 = vunpack.c.l.b16 %v1622
        %v1695 = vunpack.c.l.b16 %v1623
        %v1696 = vunpack.c.l.b16 %v1624
        %v1697 = vunpack.c.l.b16 %v1625
        %v1698 = vpack.c.b16 %v1663, %v1662
        %v1699 = vpack.c.b16 %v1665, %v1664
        %v1700 = vpack.c.b16 %v1667, %v1666
        %v1701 = vpack.c.b16 %v1669, %v1668
        %v1702 = vpack.c.b16 %v1671, %v1670
        %v1703 = vpack.c.b16 %v1673, %v1672
        %v1704 = vpack.c.b16 %v1675, %v1674
        %v1705 = vpack.c.b16 %v1677, %v1676
        %v1706 = vpack.c.b16 %v1679, %v1678
        %v1707 = vpack.c.b16 %v1681, %v1680
        %v1708 = vpack.c.b16 %v1683, %v1682
        %v1709 = vpack.c.b16 %v1685, %v1684
        %v1710 = vpack.c.b16 %v1687, %v1686
        %v1711 = vpack.c.b16 %v1689, %v1688
        %v1712 = vpack.c.b16 %v1691, %v1690
        %v1713 = vpack.c.b16 %v1693, %v1692
        %v1714 = vpack.c.b16 %v1695, %v1694
        %v1715 = vpack.c.b16 %v1697, %v1696
        %v1734 = vsel %vm1342, %v1462, 0
        %v1736 = vsel %vm1342, %v1464, 0
        %v1738 = vsel %vm1342, %v1466, 0
        %v1740 = vsel %vm1342, %v1468, 0
        %v1742 = vsel %vm1342, %v1470, 0
        %v1744 = vsel %vm1342, %v1472, 0
        %v1746 = vsel %vm1342, %v1474, 0
        %v1748 = vsel %vm1342, %v1476, 0
        %v1750 = vsel %vm1342, %v1478, 0
        %v1752 = vsel %vm1342, %v1480, 0
        %v1754 = vsel %vm1342, %v1482, 0
        %v1756 = vsel %vm1342, %v1484, 0
        %v1758 = vsel %vm1342, %v1486, 0
        %v1760 = vsel %vm1342, %v1488, 0
        %v1762 = vsel %vm1342, %v1490, 0
        %v1764 = vsel %vm1342, %v1492, 0
        %1766 = vmatprep.subr.bf16.mxu0 0
        %1767 = vmatpush1.bf16.msra.mxu0 %v1698
        %1768 = vmatprep.subr.bf16.mxu0 0
        %1769 = vmatpush1.bf16.msra.mxu0 %v1699
        %1770 = vmatprep.subr.bf16.mxu0 0
        %1771 = vmatpush1.bf16.msra.mxu0 %v1700
        %1772 = vmatprep.subr.bf16.mxu0 0
        %1773 = vmatpush1.bf16.msra.mxu0 %v1701
        %1774 = vmatprep.subr.bf16.mxu0 0
        %1775 = vmatpush1.bf16.msra.mxu0 %v1702
        %1776 = vmatprep.subr.bf16.mxu0 0
        %1777 = vmatpush1.bf16.msra.mxu0 %v1703
        %1778 = vmatprep.subr.bf16.mxu0 0
        %1779 = vmatpush1.bf16.msra.mxu0 %v1704
        %1780 = vmatprep.subr.bf16.mxu0 0
        %1781 = vmatpush1.bf16.msra.mxu0 %v1705
        %1782 = vmatprep.subr.bf16.mxu0 0
        %1783 = vmatpush1.bf16.msra.mxu0 %v1706
        %1784 = vmatprep.subr.bf16.mxu0 0
        %1785 = vmatpush1.bf16.msra.mxu0 %v1707
        %1786 = vmatprep.subr.bf16.mxu0 0
        %1787 = vmatpush1.bf16.msra.mxu0 %v1708
        %1788 = vmatprep.subr.bf16.mxu0 0
        %1789 = vmatpush1.bf16.msra.mxu0 %v1709
        %1790 = vmatprep.subr.bf16.mxu0 0
        %1791 = vmatpush1.bf16.msra.mxu0 %v1710
        %1792 = vmatprep.subr.bf16.mxu0 0
        %1793 = vmatpush1.bf16.msra.mxu0 %v1711
        %1794 = vmatprep.subr.bf16.mxu0 0
        %1795 = vmatpush1.bf16.msra.mxu0 %v1712
        %1796 = vmatprep.subr.bf16.mxu0 0
        %1797 = vmatpush1.bf16.msra.mxu0 %v1713
        %1798 = vmatprep.mubr.bf16.mxu0 %v1543
        %1799 = vmatmul.mubr.bf16.gmra.mrb[0].mxu0 %v1495
        %v1800 = vpop.f32.mrb[0].mxu0
        %v1801 = vadd.f32 0.0, %v1800
        %v1802 = vpop.f32.mrb[0].mxu0
        %v1803 = vpop.f32.mrb[0].mxu0
        %v1804 = vadd.f32 0.0, %v1803
        %v1805 = vpop.f32.mrb[0].mxu0
        %1806 = vmatprep.mubr.bf16.mxu0 %v1546
        %1807 = vmatmul.mubr.bf16.gmra.mrb[0].mxu0 %v1498
        %v1808 = vpop.f32.mrb[0].mxu0
        %v1809 = vadd.f32 0.0, %v1808
        %v1810 = vpop.f32.mrb[0].mxu0
        %v1811 = vpop.f32.mrb[0].mxu0
        %v1812 = vadd.f32 0.0, %v1811
        %v1813 = vpop.f32.mrb[0].mxu0
        %1814 = vmatprep.mubr.bf16.mxu0 %v1549
        %1815 = vmatmul.mubr.bf16.gmra.mrb[0].mxu0 %v1501
        %v1816 = vpop.f32.mrb[0].mxu0
        %v1817 = vadd.f32 0.0, %v1816
        %v1818 = vpop.f32.mrb[0].mxu0
        %v1819 = vpop.f32.mrb[0].mxu0
        %v1820 = vadd.f32 0.0, %v1819
        %v1821 = vpop.f32.mrb[0].mxu0
        %1822 = vmatprep.mubr.bf16.mxu0 %v1552
        %1823 = vmatmul.mubr.bf16.gmra.mrb[0].mxu0 %v1504
        %v1824 = vpop.f32.mrb[0].mxu0
        %v1825 = vadd.f32 0.0, %v1824
        %v1826 = vpop.f32.mrb[0].mxu0
        %v1827 = vpop.f32.mrb[0].mxu0
        %v1828 = vadd.f32 0.0, %v1827
        %v1829 = vpop.f32.mrb[0].mxu0
        %1830 = vmatprep.mubr.bf16.mxu0 %v1555
        %1831 = vmatmul.mubr.bf16.gmra.mrb[0].mxu0 %v1507
        %v1832 = vpop.f32.mrb[0].mxu0
        %v1833 = vadd.f32 0.0, %v1832
        %v1834 = vpop.f32.mrb[0].mxu0
        %v1835 = vpop.f32.mrb[0].mxu0
        %v1836 = vadd.f32 0.0, %v1835
        %v1837 = vpop.f32.mrb[0].mxu0
        %1838 = vmatprep.mubr.bf16.mxu0 %v1558
        %1839 = vmatmul.mubr.bf16.gmra.mrb[0].mxu0 %v1510
        %v1840 = vpop.f32.mrb[0].mxu0
        %v1841 = vadd.f32 0.0, %v1840
        %v1842 = vpop.f32.mrb[0].mxu0
        %v1843 = vpop.f32.mrb[0].mxu0
        %v1844 = vadd.f32 0.0, %v1843
        %v1845 = vpop.f32.mrb[0].mxu0
        %1846 = vmatprep.mubr.bf16.mxu0 %v1561
        %1847 = vmatmul.mubr.bf16.gmra.mrb[0].mxu0 %v1513
        %v1848 = vpop.f32.mrb[0].mxu0
        %v1849 = vadd.f32 0.0, %v1848
        %v1850 = vpop.f32.mrb[0].mxu0
        %v1851 = vpop.f32.mrb[0].mxu0
        %v1852 = vadd.f32 0.0, %v1851
        %v1853 = vpop.f32.mrb[0].mxu0
        %1854 = vmatprep.mubr.bf16.mxu0 %v1564
        %1855 = vmatmul.mubr.bf16.gmra.mrb[0].mxu0 %v1516
        %v1856 = vpop.f32.mrb[0].mxu0
        %v1857 = vadd.f32 0.0, %v1856
        %v1858 = vpop.f32.mrb[0].mxu0
        %v1859 = vpop.f32.mrb[0].mxu0
        %v1860 = vadd.f32 0.0, %v1859
        %v1861 = vpop.f32.mrb[0].mxu0
        %1862 = vmatprep.mubr.bf16.mxu0 %v1567
        %1863 = vmatmul.mubr.bf16.gmra.mrb[0].mxu0 %v1519
        %v1864 = vpop.f32.mrb[0].mxu0
        %v1865 = vadd.f32 0.0, %v1864
        %v1866 = vpop.f32.mrb[0].mxu0
        %v1867 = vpop.f32.mrb[0].mxu0
        %v1868 = vadd.f32 0.0, %v1867
        %v1869 = vpop.f32.mrb[0].mxu0
        %1870 = vmatprep.mubr.bf16.mxu0 %v1570
        %1871 = vmatmul.mubr.bf16.gmra.mrb[0].mxu0 %v1522
        %v1872 = vpop.f32.mrb[0].mxu0
        %v1873 = vadd.f32 0.0, %v1872
        %v1874 = vpop.f32.mrb[0].mxu0
        %v1875 = vpop.f32.mrb[0].mxu0
        %v1876 = vadd.f32 0.0, %v1875
        %v1877 = vpop.f32.mrb[0].mxu0
        %1878 = vmatprep.mubr.bf16.mxu0 %v1573
        %1879 = vmatmul.mubr.bf16.gmra.mrb[0].mxu0 %v1525
        %v1880 = vpop.f32.mrb[0].mxu0
        %v1881 = vadd.f32 0.0, %v1880
        %v1882 = vpop.f32.mrb[0].mxu0
        %v1883 = vpop.f32.mrb[0].mxu0
        %v1884 = vadd.f32 0.0, %v1883
        %v1885 = vpop.f32.mrb[0].mxu0
        %1886 = vmatprep.mubr.bf16.mxu0 %v1576
        %1887 = vmatmul.mubr.bf16.gmra.mrb[0].mxu0 %v1528
        %v1888 = vpop.f32.mrb[0].mxu0
        %v1889 = vadd.f32 0.0, %v1888
        %v1890 = vpop.f32.mrb[0].mxu0
        %v1891 = vpop.f32.mrb[0].mxu0
        %v1892 = vadd.f32 0.0, %v1891
        %v1893 = vpop.f32.mrb[0].mxu0
        %1894 = vmatprep.mubr.bf16.mxu0 %v1579
        %1895 = vmatmul.mubr.bf16.gmra.mrb[0].mxu0 %v1531
        %v1896 = vpop.f32.mrb[0].mxu0
        %v1897 = vadd.f32 0.0, %v1896
        %v1898 = vpop.f32.mrb[0].mxu0
        %v1899 = vpop.f32.mrb[0].mxu0
        %v1900 = vadd.f32 0.0, %v1899
        %v1901 = vpop.f32.mrb[0].mxu0
        %1902 = vmatprep.mubr.bf16.mxu0 %v1582
        %1903 = vmatmul.mubr.bf16.gmra.mrb[0].mxu0 %v1534
        %v1904 = vpop.f32.mrb[0].mxu0
        %v1905 = vadd.f32 0.0, %v1904
        %v1906 = vpop.f32.mrb[0].mxu0
        %v1907 = vpop.f32.mrb[0].mxu0
        %v1908 = vadd.f32 0.0, %v1907
        %v1909 = vpop.f32.mrb[0].mxu0
        %1910 = vmatprep.mubr.bf16.mxu0 %v1585
        %1911 = vmatmul.mubr.bf16.gmra.mrb[0].mxu0 %v1537
        %v1912 = vpop.f32.mrb[0].mxu0
        %v1913 = vadd.f32 0.0, %v1912
        %v1914 = vpop.f32.mrb[0].mxu0
        %v1915 = vpop.f32.mrb[0].mxu0
        %v1916 = vadd.f32 0.0, %v1915
        %v1917 = vpop.f32.mrb[0].mxu0
        %1918 = vmatprep.mubr.bf16.mxu0 %v1588
        %1919 = vmatmul.mubr.bf16.gmra.mrb[0].mxu0 %v1540
        %v1920 = vpop.f32.mrb[0].mxu0
        %v1921 = vadd.f32 0.0, %v1920
        %v1922 = vpop.f32.mrb[0].mxu0
        %v1923 = vpop.f32.mrb[0].mxu0
        %v1924 = vadd.f32 0.0, %v1923
        %v1925 = vpop.f32.mrb[0].mxu0
        %1926 = vdwg.mxu0
        %1927 = vmatprep.subr.bf16.mxu0 0
        %1928 = vmatpush1.bf16.msra.mxu0 %v1714
        %1929 = vmatprep.subr.bf16.mxu0 0
        %1930 = vmatpush1.bf16.msra.mxu0 %v1715
        %1931 = vmatprep.subr.bf16.mxu0 0
        %1932 = vmatpush1.bf16.msra.mxu0 0
        %1933 = vmatprep.subr.bf16.mxu0 0
        %1934 = vmatpush1.bf16.msra.mxu0 0
        %1935 = vmatprep.subr.bf16.mxu0 0
        %1936 = vmatpush1.bf16.msra.mxu0 0
        %1937 = vmatprep.subr.bf16.mxu0 0
        %1938 = vmatpush1.bf16.msra.mxu0 0
        %1939 = vmatprep.subr.bf16.mxu0 0
        %1940 = vmatpush1.bf16.msra.mxu0 0
        %1941 = vmatprep.subr.bf16.mxu0 0
        %1942 = vmatpush1.bf16.msra.mxu0 0
        %1943 = vmatprep.subr.bf16.mxu0 0
        %1944 = vmatpush1.bf16.msra.mxu0 0
        %1945 = vmatprep.subr.bf16.mxu0 0
        %1946 = vmatpush1.bf16.msra.mxu0 0
        %1947 = vmatprep.subr.bf16.mxu0 0
        %1948 = vmatpush1.bf16.msra.mxu0 0
        %1949 = vmatprep.subr.bf16.mxu0 0
        %1950 = vmatpush1.bf16.msra.mxu0 0
        %1951 = vmatprep.subr.bf16.mxu0 0
        %1952 = vmatpush1.bf16.msra.mxu0 0
        %1953 = vmatprep.subr.bf16.mxu0 0
        %1954 = vmatpush1.bf16.msra.mxu0 0
        %1955 = vmatprep.subr.bf16.mxu0 0
        %1956 = vmatpush1.bf16.msra.mxu0 0
        %1957 = vmatprep.subr.bf16.mxu0 0
        %1958 = vmatpush1.bf16.msra.mxu0 0
        %1959 = vmatprep.mubr.bf16.mxu0 0
        %1960 = vmatmul.mubr.bf16.gmra.mrb[0].mxu0 %v1734
        %v1961 = vpop.f32.mrb[0].mxu0
        %v1962 = vadd.f32 %v1801, %v1961
        %v1963 = vpop.f32.mrb[0].mxu0
        %v1964 = vpop.f32.mrb[0].mxu0
        %v1965 = vadd.f32 %v1804, %v1964
        %v1966 = vpop.f32.mrb[0].mxu0
        %1967 = vmatprep.mubr.bf16.mxu0 0
        %1968 = vmatmul.mubr.bf16.gmra.mrb[0].mxu0 %v1736
        %v1969 = vpop.f32.mrb[0].mxu0
        %v1970 = vadd.f32 %v1809, %v1969
        %v1971 = vpop.f32.mrb[0].mxu0
        %v1972 = vpop.f32.mrb[0].mxu0
        %v1973 = vadd.f32 %v1812, %v1972
        %v1974 = vpop.f32.mrb[0].mxu0
        %1975 = vmatprep.mubr.bf16.mxu0 0
        %1976 = vmatmul.mubr.bf16.gmra.mrb[0].mxu0 %v1738
        %v1977 = vpop.f32.mrb[0].mxu0
        %v1978 = vadd.f32 %v1817, %v1977
        %v1979 = vpop.f32.mrb[0].mxu0
        %v1980 = vpop.f32.mrb[0].mxu0
        %v1981 = vadd.f32 %v1820, %v1980
        %v1982 = vpop.f32.mrb[0].mxu0
        %1983 = vmatprep.mubr.bf16.mxu0 0
        %1984 = vmatmul.mubr.bf16.gmra.mrb[0].mxu0 %v1740
        %v1985 = vpop.f32.mrb[0].mxu0
        %v1986 = vadd.f32 %v1825, %v1985
        %v1987 = vpop.f32.mrb[0].mxu0
        %v1988 = vpop.f32.mrb[0].mxu0
        %v1989 = vadd.f32 %v1828, %v1988
        %v1990 = vpop.f32.mrb[0].mxu0
        %1991 = vmatprep.mubr.bf16.mxu0 0
        %1992 = vmatmul.mubr.bf16.gmra.mrb[0].mxu0 %v1742
        %v1993 = vpop.f32.mrb[0].mxu0
        %v1994 = vadd.f32 %v1833, %v1993
        %v1995 = vpop.f32.mrb[0].mxu0
        %v1996 = vpop.f32.mrb[0].mxu0
        %v1997 = vadd.f32 %v1836, %v1996
        %v1998 = vpop.f32.mrb[0].mxu0
        %1999 = vmatprep.mubr.bf16.mxu0 0
        %2000 = vmatmul.mubr.bf16.gmra.mrb[0].mxu0 %v1744
        %v2001 = vpop.f32.mrb[0].mxu0
        %v2002 = vadd.f32 %v1841, %v2001
        %v2003 = vpop.f32.mrb[0].mxu0
        %v2004 = vpop.f32.mrb[0].mxu0
        %v2005 = vadd.f32 %v1844, %v2004
        %v2006 = vpop.f32.mrb[0].mxu0
        %2007 = vmatprep.mubr.bf16.mxu0 0
        %2008 = vmatmul.mubr.bf16.gmra.mrb[0].mxu0 %v1746
        %v2009 = vpop.f32.mrb[0].mxu0
        %v2010 = vadd.f32 %v1849, %v2009
        %v2011 = vpop.f32.mrb[0].mxu0
        %v2012 = vpop.f32.mrb[0].mxu0
        %v2013 = vadd.f32 %v1852, %v2012
        %v2014 = vpop.f32.mrb[0].mxu0
        %2015 = vmatprep.mubr.bf16.mxu0 0
        %2016 = vmatmul.mubr.bf16.gmra.mrb[0].mxu0 %v1748
        %v2017 = vpop.f32.mrb[0].mxu0
        %v2018 = vadd.f32 %v1857, %v2017
        %v2019 = vpop.f32.mrb[0].mxu0
        %v2020 = vpop.f32.mrb[0].mxu0
        %v2021 = vadd.f32 %v1860, %v2020
        %v2022 = vpop.f32.mrb[0].mxu0
        %2023 = vmatprep.mubr.bf16.mxu0 0
        %2024 = vmatmul.mubr.bf16.gmra.mrb[0].mxu0 %v1750
        %v2025 = vpop.f32.mrb[0].mxu0
        %v2026 = vadd.f32 %v1865, %v2025
        %v2027 = vpop.f32.mrb[0].mxu0
        %v2028 = vpop.f32.mrb[0].mxu0
        %v2029 = vadd.f32 %v1868, %v2028
        %v2030 = vpop.f32.mrb[0].mxu0
        %2031 = vmatprep.mubr.bf16.mxu0 0
        %2032 = vmatmul.mubr.bf16.gmra.mrb[0].mxu0 %v1752
        %v2033 = vpop.f32.mrb[0].mxu0
        %v2034 = vadd.f32 %v1873, %v2033
        %v2035 = vpop.f32.mrb[0].mxu0
        %v2036 = vpop.f32.mrb[0].mxu0
        %v2037 = vadd.f32 %v1876, %v2036
        %v2038 = vpop.f32.mrb[0].mxu0
        %2039 = vmatprep.mubr.bf16.mxu0 0
        %2040 = vmatmul.mubr.bf16.gmra.mrb[0].mxu0 %v1754
        %v2041 = vpop.f32.mrb[0].mxu0
        %v2042 = vadd.f32 %v1881, %v2041
        %v2043 = vpop.f32.mrb[0].mxu0
        %v2044 = vpop.f32.mrb[0].mxu0
        %v2045 = vadd.f32 %v1884, %v2044
        %v2046 = vpop.f32.mrb[0].mxu0
        %2047 = vmatprep.mubr.bf16.mxu0 0
        %2048 = vmatmul.mubr.bf16.gmra.mrb[0].mxu0 %v1756
        %v2049 = vpop.f32.mrb[0].mxu0
        %v2050 = vadd.f32 %v1889, %v2049
        %v2051 = vpop.f32.mrb[0].mxu0
        %v2052 = vpop.f32.mrb[0].mxu0
        %v2053 = vadd.f32 %v1892, %v2052
        %v2054 = vpop.f32.mrb[0].mxu0
        %2055 = vmatprep.mubr.bf16.mxu0 0
        %2056 = vmatmul.mubr.bf16.gmra.mrb[0].mxu0 %v1758
        %v2057 = vpop.f32.mrb[0].mxu0
        %v2058 = vadd.f32 %v1897, %v2057
        %v2059 = vpop.f32.mrb[0].mxu0
        %v2060 = vpop.f32.mrb[0].mxu0
        %v2061 = vadd.f32 %v1900, %v2060
        %v2062 = vpop.f32.mrb[0].mxu0
        %2063 = vmatprep.mubr.bf16.mxu0 0
        %2064 = vmatmul.mubr.bf16.gmra.mrb[0].mxu0 %v1760
        %v2065 = vpop.f32.mrb[0].mxu0
        %v2066 = vadd.f32 %v1905, %v2065
        %v2067 = vpop.f32.mrb[0].mxu0
        %v2068 = vpop.f32.mrb[0].mxu0
        %v2069 = vadd.f32 %v1908, %v2068
        %v2070 = vpop.f32.mrb[0].mxu0
        %2071 = vmatprep.mubr.bf16.mxu0 0
        %2072 = vmatmul.mubr.bf16.gmra.mrb[0].mxu0 %v1762
        %v2073 = vpop.f32.mrb[0].mxu0
        %v2074 = vadd.f32 %v1913, %v2073
        %v2075 = vpop.f32.mrb[0].mxu0
        %v2076 = vpop.f32.mrb[0].mxu0
        %v2077 = vadd.f32 %v1916, %v2076
        %v2078 = vpop.f32.mrb[0].mxu0
        %2079 = vmatprep.mubr.bf16.mxu0 0
        %2080 = vmatmul.mubr.bf16.gmra.mrb[0].mxu0 %v1764
        %v2081 = vpop.f32.mrb[0].mxu0
        %v2082 = vadd.f32 %v1921, %v2081
        %v2083 = vpop.f32.mrb[0].mxu0
        %v2084 = vpop.f32.mrb[0].mxu0
        %v2085 = vadd.f32 %v1924, %v2084
        %v2086 = vpop.f32.mrb[0].mxu0
        %2087 = vdwg.mxu0
        %v2088 = vld [vmem:[%s5] sm:$0x1]
        %v2090 = vlaneseq
        %v2091 = vshrl.u32 %v2090, 7
        %v2092 = vsub.s32 0, %v2091
        %v2093 = vrot.slane %v2088, %v2092
        %v2095 = vmul.f32 %v1962, %v2093
        %v2096 = vmul.f32 %v1965, %v2093
        %v2097 = vmul.f32 %v1970, %v2093
        %v2098 = vmul.f32 %v1973, %v2093
        %v2099 = vmul.f32 %v1978, %v2093
        %v2100 = vmul.f32 %v1981, %v2093
        %v2101 = vmul.f32 %v1986, %v2093
        %v2102 = vmul.f32 %v1989, %v2093
        %v2103 = vmul.f32 %v1994, %v2093
        %v2104 = vmul.f32 %v1997, %v2093
        %v2105 = vmul.f32 %v2002, %v2093
        %v2106 = vmul.f32 %v2005, %v2093
        %v2107 = vmul.f32 %v2010, %v2093
        %v2108 = vmul.f32 %v2013, %v2093
        %v2109 = vmul.f32 %v2018, %v2093
        %v2110 = vmul.f32 %v2021, %v2093
        %v2111 = vmul.f32 %v2026, %v2093
        %v2112 = vmul.f32 %v2029, %v2093
        %v2113 = vmul.f32 %v2034, %v2093
        %v2114 = vmul.f32 %v2037, %v2093
        %v2115 = vmul.f32 %v2042, %v2093
        %v2116 = vmul.f32 %v2045, %v2093
        %v2117 = vmul.f32 %v2050, %v2093
        %v2118 = vmul.f32 %v2053, %v2093
        %v2119 = vmul.f32 %v2058, %v2093
        %v2120 = vmul.f32 %v2061, %v2093
        %v2121 = vmul.f32 %v2066, %v2093
        %v2122 = vmul.f32 %v2069, %v2093
        %v2123 = vmul.f32 %v2074, %v2093
        %v2124 = vmul.f32 %v2077, %v2093
        %v2125 = vmul.f32 %v2082, %v2093
        %v2126 = vmul.f32 %v2085, %v2093
        %v2127 = vld [vmem:[%s6] sm:$0x1]
        %v2129 = vlaneseq
        %v2130 = vshrl.u32 %v2129, 7
        %v2131 = vsub.s32 0, %v2130
        %v2132 = vrot.slane %v2127, %v2131
        %v2134 = vadd.f32 %v2095, %v2132
        %v2135 = vadd.f32 %v2096, %v2132
        %v2136 = vadd.f32 %v2097, %v2132
        %v2137 = vadd.f32 %v2098, %v2132
        %v2138 = vadd.f32 %v2099, %v2132
        %v2139 = vadd.f32 %v2100, %v2132
        %v2140 = vadd.f32 %v2101, %v2132
        %v2141 = vadd.f32 %v2102, %v2132
        %v2142 = vadd.f32 %v2103, %v2132
        %v2143 = vadd.f32 %v2104, %v2132
        %v2144 = vadd.f32 %v2105, %v2132
        %v2145 = vadd.f32 %v2106, %v2132
        %v2146 = vadd.f32 %v2107, %v2132
        %v2147 = vadd.f32 %v2108, %v2132
        %v2148 = vadd.f32 %v2109, %v2132
        %v2149 = vadd.f32 %v2110, %v2132
        %v2150 = vadd.f32 %v2111, %v2132
        %v2151 = vadd.f32 %v2112, %v2132
        %v2152 = vadd.f32 %v2113, %v2132
        %v2153 = vadd.f32 %v2114, %v2132
        %v2154 = vadd.f32 %v2115, %v2132
        %v2155 = vadd.f32 %v2116, %v2132
        %v2156 = vadd.f32 %v2117, %v2132
        %v2157 = vadd.f32 %v2118, %v2132
        %v2158 = vadd.f32 %v2119, %v2132
        %v2159 = vadd.f32 %v2120, %v2132
        %v2160 = vadd.f32 %v2121, %v2132
        %v2161 = vadd.f32 %v2122, %v2132
        %v2162 = vadd.f32 %v2123, %v2132
        %v2163 = vadd.f32 %v2124, %v2132
        %v2164 = vadd.f32 %v2125, %v2132
        %v2165 = vadd.f32 %v2126, %v2132
        %v2166 = vmax.f32 %v2134, 0.0
        %v2167 = vmax.f32 %v2135, 0.0
        %v2168 = vmax.f32 %v2136, 0.0
        %v2169 = vmax.f32 %v2137, 0.0
        %v2170 = vmax.f32 %v2138, 0.0
        %v2171 = vmax.f32 %v2139, 0.0
        %v2172 = vmax.f32 %v2140, 0.0
        %v2173 = vmax.f32 %v2141, 0.0
        %v2174 = vmax.f32 %v2142, 0.0
        %v2175 = vmax.f32 %v2143, 0.0
        %v2176 = vmax.f32 %v2144, 0.0
        %v2177 = vmax.f32 %v2145, 0.0
        %v2178 = vmax.f32 %v2146, 0.0
        %v2179 = vmax.f32 %v2147, 0.0
        %v2180 = vmax.f32 %v2148, 0.0
        %v2181 = vmax.f32 %v2149, 0.0
        %v2182 = vmax.f32 %v2150, 0.0
        %v2183 = vmax.f32 %v2151, 0.0
        %v2184 = vmax.f32 %v2152, 0.0
        %v2185 = vmax.f32 %v2153, 0.0
        %v2186 = vmax.f32 %v2154, 0.0
        %v2187 = vmax.f32 %v2155, 0.0
        %v2188 = vmax.f32 %v2156, 0.0
        %v2189 = vmax.f32 %v2157, 0.0
        %v2190 = vmax.f32 %v2158, 0.0
        %v2191 = vmax.f32 %v2159, 0.0
        %v2192 = vmax.f32 %v2160, 0.0
        %v2193 = vmax.f32 %v2161, 0.0
        %v2194 = vmax.f32 %v2162, 0.0
        %v2195 = vmax.f32 %v2163, 0.0
        %v2196 = vmax.f32 %v2164, 0.0
        %v2197 = vmax.f32 %v2165, 0.0
        %v2198 = vpack.c.bf16 %v2167, %v2166
        %v2199 = vpack.c.bf16 %v2169, %v2168
        %v2200 = vpack.c.bf16 %v2171, %v2170
        %v2201 = vpack.c.bf16 %v2173, %v2172
        %v2202 = vpack.c.bf16 %v2175, %v2174
        %v2203 = vpack.c.bf16 %v2177, %v2176
        %v2204 = vpack.c.bf16 %v2179, %v2178
        %v2205 = vpack.c.bf16 %v2181, %v2180
        %v2206 = vpack.c.bf16 %v2183, %v2182
        %v2207 = vpack.c.bf16 %v2185, %v2184
        %v2208 = vpack.c.bf16 %v2187, %v2186
        %v2209 = vpack.c.bf16 %v2189, %v2188
        %v2210 = vpack.c.bf16 %v2191, %v2190
        %v2211 = vpack.c.bf16 %v2193, %v2192
        %v2212 = vpack.c.bf16 %v2195, %v2194
        %v2213 = vpack.c.bf16 %v2197, %v2196
        %v2214 = vld [vmem:[%s7] sm:$0xf]
        %v2215 = vld [vmem:[%s7 + $0x4] sm:$0xf]
        %v2216 = vld [vmem:[%s7 + $0x8] sm:$0xf]
        %v2217 = vld [vmem:[%s7 + $0xc] sm:$0xf]
        %v2222 = vunpack.c.l.b16 %v2214
        %v2223 = vunpack.c.l.b16 %v2215
        %v2224 = vunpack.c.l.b16 %v2216
        %v2225 = vunpack.c.l.b16 %v2217
        %v2226 = vpack.c.b16 %v2223, %v2222
        %v2227 = vpack.c.b16 %v2225, %v2224
        %v2231 = vsel %vm1342, %v2198, 0
        %v2234 = vsel %vm1342, %v2199, 0
        %v2237 = vsel %vm1342, %v2200, 0
        %v2240 = vsel %vm1342, %v2201, 0
        %v2243 = vsel %vm1342, %v2202, 0
        %v2246 = vsel %vm1342, %v2203, 0
        %v2249 = vsel %vm1342, %v2204, 0
        %v2252 = vsel %vm1342, %v2205, 0
        %v2255 = vsel %vm1342, %v2206, 0
        %v2258 = vsel %vm1342, %v2207, 0
        %v2261 = vsel %vm1342, %v2208, 0
        %v2264 = vsel %vm1342, %v2209, 0
        %v2267 = vsel %vm1342, %v2210, 0
        %v2270 = vsel %vm1342, %v2211, 0
        %v2273 = vsel %vm1342, %v2212, 0
        %v2276 = vsel %vm1342, %v2213, 0
        %2278 = vmatprep.subr.bf16.mxu0 0
        %2279 = vmatpush1.bf16.msra.mxu0 %v2226
        %2280 = vmatprep.subr.bf16.mxu0 0
        %2281 = vmatpush1.bf16.msra.mxu0 %v2227
        %2282 = vmatprep.subr.bf16.mxu0 0
        %2283 = vmatpush1.bf16.msra.mxu0 0
        %2284 = vmatprep.subr.bf16.mxu0 0
        %2285 = vmatpush1.bf16.msra.mxu0 0
        %2286 = vmatprep.subr.bf16.mxu0 0
        %2287 = vmatpush1.bf16.msra.mxu0 0
        %2288 = vmatprep.subr.bf16.mxu0 0
        %2289 = vmatpush1.bf16.msra.mxu0 0
        %2290 = vmatprep.subr.bf16.mxu0 0
        %2291 = vmatpush1.bf16.msra.mxu0 0
        %2292 = vmatprep.subr.bf16.mxu0 0
        %2293 = vmatpush1.bf16.msra.mxu0 0
        %2294 = vmatprep.subr.bf16.mxu0 0
        %2295 = vmatpush1.bf16.msra.mxu0 0
        %2296 = vmatprep.subr.bf16.mxu0 0
        %2297 = vmatpush1.bf16.msra.mxu0 0
        %2298 = vmatprep.subr.bf16.mxu0 0
        %2299 = vmatpush1.bf16.msra.mxu0 0
        %2300 = vmatprep.subr.bf16.mxu0 0
        %2301 = vmatpush1.bf16.msra.mxu0 0
        %2302 = vmatprep.subr.bf16.mxu0 0
        %2303 = vmatpush1.bf16.msra.mxu0 0
        %2304 = vmatprep.subr.bf16.mxu0 0
        %2305 = vmatpush1.bf16.msra.mxu0 0
        %2306 = vmatprep.subr.bf16.mxu0 0
        %2307 = vmatpush1.bf16.msra.mxu0 0
        %2308 = vmatprep.subr.bf16.mxu0 0
        %2309 = vmatpush1.bf16.msra.mxu0 0
        %2310 = vmatprep.mubr.bf16.mxu0 0
        %2311 = vmatmul.mubr.bf16.gmra.mrb[0].mxu0 %v2231
        %v2312 = vpop.f32.mrb[0].mxu0
        %v2313 = vadd.f32 0.0, %v2312
        %v2314 = vpop.f32.mrb[0].mxu0
        %v2315 = vpop.f32.mrb[0].mxu0
        %v2316 = vadd.f32 0.0, %v2315
        %v2317 = vpop.f32.mrb[0].mxu0
        %2318 = vmatprep.mubr.bf16.mxu0 0
        %2319 = vmatmul.mubr.bf16.gmra.mrb[0].mxu0 %v2234
        %v2320 = vpop.f32.mrb[0].mxu0
        %v2321 = vadd.f32 0.0, %v2320
        %v2322 = vpop.f32.mrb[0].mxu0
        %v2323 = vpop.f32.mrb[0].mxu0
        %v2324 = vadd.f32 0.0, %v2323
        %v2325 = vpop.f32.mrb[0].mxu0
        %2326 = vmatprep.mubr.bf16.mxu0 0
        %2327 = vmatmul.mubr.bf16.gmra.mrb[0].mxu0 %v2237
        %v2328 = vpop.f32.mrb[0].mxu0
        %v2329 = vadd.f32 0.0, %v2328
        %v2330 = vpop.f32.mrb[0].mxu0
        %v2331 = vpop.f32.mrb[0].mxu0
        %v2332 = vadd.f32 0.0, %v2331
        %v2333 = vpop.f32.mrb[0].mxu0
        %2334 = vmatprep.mubr.bf16.mxu0 0
        %2335 = vmatmul.mubr.bf16.gmra.mrb[0].mxu0 %v2240
        %v2336 = vpop.f32.mrb[0].mxu0
        %v2337 = vadd.f32 0.0, %v2336
        %v2338 = vpop.f32.mrb[0].mxu0
        %v2339 = vpop.f32.mrb[0].mxu0
        %v2340 = vadd.f32 0.0, %v2339
        %v2341 = vpop.f32.mrb[0].mxu0
        %2342 = vmatprep.mubr.bf16.mxu0 0
        %2343 = vmatmul.mubr.bf16.gmra.mrb[0].mxu0 %v2243
        %v2344 = vpop.f32.mrb[0].mxu0
        %v2345 = vadd.f32 0.0, %v2344
        %v2346 = vpop.f32.mrb[0].mxu0
        %v2347 = vpop.f32.mrb[0].mxu0
        %v2348 = vadd.f32 0.0, %v2347
        %v2349 = vpop.f32.mrb[0].mxu0
        %2350 = vmatprep.mubr.bf16.mxu0 0
        %2351 = vmatmul.mubr.bf16.gmra.mrb[0].mxu0 %v2246
        %v2352 = vpop.f32.mrb[0].mxu0
        %v2353 = vadd.f32 0.0, %v2352
        %v2354 = vpop.f32.mrb[0].mxu0
        %v2355 = vpop.f32.mrb[0].mxu0
        %v2356 = vadd.f32 0.0, %v2355
        %v2357 = vpop.f32.mrb[0].mxu0
        %2358 = vmatprep.mubr.bf16.mxu0 0
        %2359 = vmatmul.mubr.bf16.gmra.mrb[0].mxu0 %v2249
        %v2360 = vpop.f32.mrb[0].mxu0
        %v2361 = vadd.f32 0.0, %v2360
        %v2362 = vpop.f32.mrb[0].mxu0
        %v2363 = vpop.f32.mrb[0].mxu0
        %v2364 = vadd.f32 0.0, %v2363
        %v2365 = vpop.f32.mrb[0].mxu0
        %2366 = vmatprep.mubr.bf16.mxu0 0
        %2367 = vmatmul.mubr.bf16.gmra.mrb[0].mxu0 %v2252
        %v2368 = vpop.f32.mrb[0].mxu0
        %v2369 = vadd.f32 0.0, %v2368
        %v2370 = vpop.f32.mrb[0].mxu0
        %v2371 = vpop.f32.mrb[0].mxu0
        %v2372 = vadd.f32 0.0, %v2371
        %v2373 = vpop.f32.mrb[0].mxu0
        %2374 = vmatprep.mubr.bf16.mxu0 0
        %2375 = vmatmul.mubr.bf16.gmra.mrb[0].mxu0 %v2255
        %v2376 = vpop.f32.mrb[0].mxu0
        %v2377 = vadd.f32 0.0, %v2376
        %v2378 = vpop.f32.mrb[0].mxu0
        %v2379 = vpop.f32.mrb[0].mxu0
        %v2380 = vadd.f32 0.0, %v2379
        %v2381 = vpop.f32.mrb[0].mxu0
        %2382 = vmatprep.mubr.bf16.mxu0 0
        %2383 = vmatmul.mubr.bf16.gmra.mrb[0].mxu0 %v2258
        %v2384 = vpop.f32.mrb[0].mxu0
        %v2385 = vadd.f32 0.0, %v2384
        %v2386 = vpop.f32.mrb[0].mxu0
        %v2387 = vpop.f32.mrb[0].mxu0
        %v2388 = vadd.f32 0.0, %v2387
        %v2389 = vpop.f32.mrb[0].mxu0
        %2390 = vmatprep.mubr.bf16.mxu0 0
        %2391 = vmatmul.mubr.bf16.gmra.mrb[0].mxu0 %v2261
        %v2392 = vpop.f32.mrb[0].mxu0
        %v2393 = vadd.f32 0.0, %v2392
        %v2394 = vpop.f32.mrb[0].mxu0
        %v2395 = vpop.f32.mrb[0].mxu0
        %v2396 = vadd.f32 0.0, %v2395
        %v2397 = vpop.f32.mrb[0].mxu0
        %2398 = vmatprep.mubr.bf16.mxu0 0
        %2399 = vmatmul.mubr.bf16.gmra.mrb[0].mxu0 %v2264
        %v2400 = vpop.f32.mrb[0].mxu0
        %v2401 = vadd.f32 0.0, %v2400
        %v2402 = vpop.f32.mrb[0].mxu0
        %v2403 = vpop.f32.mrb[0].mxu0
        %v2404 = vadd.f32 0.0, %v2403
        %v2405 = vpop.f32.mrb[0].mxu0
        %2406 = vmatprep.mubr.bf16.mxu0 0
        %2407 = vmatmul.mubr.bf16.gmra.mrb[0].mxu0 %v2267
        %v2408 = vpop.f32.mrb[0].mxu0
        %v2409 = vadd.f32 0.0, %v2408
        %v2410 = vpop.f32.mrb[0].mxu0
        %v2411 = vpop.f32.mrb[0].mxu0
        %v2412 = vadd.f32 0.0, %v2411
        %v2413 = vpop.f32.mrb[0].mxu0
        %2414 = vmatprep.mubr.bf16.mxu0 0
        %2415 = vmatmul.mubr.bf16.gmra.mrb[0].mxu0 %v2270
        %v2416 = vpop.f32.mrb[0].mxu0
        %v2417 = vadd.f32 0.0, %v2416
        %v2418 = vpop.f32.mrb[0].mxu0
        %v2419 = vpop.f32.mrb[0].mxu0
        %v2420 = vadd.f32 0.0, %v2419
        %v2421 = vpop.f32.mrb[0].mxu0
        %2422 = vmatprep.mubr.bf16.mxu0 0
        %2423 = vmatmul.mubr.bf16.gmra.mrb[0].mxu0 %v2273
        %v2424 = vpop.f32.mrb[0].mxu0
        %v2425 = vadd.f32 0.0, %v2424
        %v2426 = vpop.f32.mrb[0].mxu0
        %v2427 = vpop.f32.mrb[0].mxu0
        %v2428 = vadd.f32 0.0, %v2427
        %v2429 = vpop.f32.mrb[0].mxu0
        %2430 = vmatprep.mubr.bf16.mxu0 0
        %2431 = vmatmul.mubr.bf16.gmra.mrb[0].mxu0 %v2276
        %v2432 = vpop.f32.mrb[0].mxu0
        %v2433 = vadd.f32 0.0, %v2432
        %v2434 = vpop.f32.mrb[0].mxu0
        %v2435 = vpop.f32.mrb[0].mxu0
        %v2436 = vadd.f32 0.0, %v2435
        %v2437 = vpop.f32.mrb[0].mxu0
        %2438 = vdwg.mxu0
        %v2439 = vld [vmem:[%s8] sm:$0x1]
        %v2441 = vlaneseq
        %v2442 = vshrl.u32 %v2441, 7
        %v2443 = vsub.s32 0, %v2442
        %v2444 = vrot.slane %v2439, %v2443
        %v2446 = vmul.f32 %v2313, %v2444
        %v2447 = vmul.f32 %v2316, %v2444
        %v2448 = vmul.f32 %v2321, %v2444
        %v2449 = vmul.f32 %v2324, %v2444
        %v2450 = vmul.f32 %v2329, %v2444
        %v2451 = vmul.f32 %v2332, %v2444
        %v2452 = vmul.f32 %v2337, %v2444
        %v2453 = vmul.f32 %v2340, %v2444
        %v2454 = vmul.f32 %v2345, %v2444
        %v2455 = vmul.f32 %v2348, %v2444
        %v2456 = vmul.f32 %v2353, %v2444
        %v2457 = vmul.f32 %v2356, %v2444
        %v2458 = vmul.f32 %v2361, %v2444
        %v2459 = vmul.f32 %v2364, %v2444
        %v2460 = vmul.f32 %v2369, %v2444
        %v2461 = vmul.f32 %v2372, %v2444
        %v2462 = vmul.f32 %v2377, %v2444
        %v2463 = vmul.f32 %v2380, %v2444
        %v2464 = vmul.f32 %v2385, %v2444
        %v2465 = vmul.f32 %v2388, %v2444
        %v2466 = vmul.f32 %v2393, %v2444
        %v2467 = vmul.f32 %v2396, %v2444
        %v2468 = vmul.f32 %v2401, %v2444
        %v2469 = vmul.f32 %v2404, %v2444
        %v2470 = vmul.f32 %v2409, %v2444
        %v2471 = vmul.f32 %v2412, %v2444
        %v2472 = vmul.f32 %v2417, %v2444
        %v2473 = vmul.f32 %v2420, %v2444
        %v2474 = vmul.f32 %v2425, %v2444
        %v2475 = vmul.f32 %v2428, %v2444
        %v2476 = vmul.f32 %v2433, %v2444
        %v2477 = vmul.f32 %v2436, %v2444
        %v2478 = vld [vmem:[%s9] sm:$0x1]
        %v2480 = vlaneseq
        %v2481 = vshrl.u32 %v2480, 7
        %v2482 = vsub.s32 0, %v2481
        %v2483 = vrot.slane %v2478, %v2482
        %v2485 = vadd.f32 %v2446, %v2483
        %v2486 = vadd.f32 %v2447, %v2483
        %v2487 = vadd.f32 %v2448, %v2483
        %v2488 = vadd.f32 %v2449, %v2483
        %v2489 = vadd.f32 %v2450, %v2483
        %v2490 = vadd.f32 %v2451, %v2483
        %v2491 = vadd.f32 %v2452, %v2483
        %v2492 = vadd.f32 %v2453, %v2483
        %v2493 = vadd.f32 %v2454, %v2483
        %v2494 = vadd.f32 %v2455, %v2483
        %v2495 = vadd.f32 %v2456, %v2483
        %v2496 = vadd.f32 %v2457, %v2483
        %v2497 = vadd.f32 %v2458, %v2483
        %v2498 = vadd.f32 %v2459, %v2483
        %v2499 = vadd.f32 %v2460, %v2483
        %v2500 = vadd.f32 %v2461, %v2483
        %v2501 = vadd.f32 %v2462, %v2483
        %v2502 = vadd.f32 %v2463, %v2483
        %v2503 = vadd.f32 %v2464, %v2483
        %v2504 = vadd.f32 %v2465, %v2483
        %v2505 = vadd.f32 %v2466, %v2483
        %v2506 = vadd.f32 %v2467, %v2483
        %v2507 = vadd.f32 %v2468, %v2483
        %v2508 = vadd.f32 %v2469, %v2483
        %v2509 = vadd.f32 %v2470, %v2483
        %v2510 = vadd.f32 %v2471, %v2483
        %v2511 = vadd.f32 %v2472, %v2483
        %v2512 = vadd.f32 %v2473, %v2483
        %v2513 = vadd.f32 %v2474, %v2483
        %v2514 = vadd.f32 %v2475, %v2483
        %v2515 = vadd.f32 %v2476, %v2483
        %v2516 = vadd.f32 %v2477, %v2483
        %v2517 = vadd.f32 %v2485, %v394
        %v2518 = vadd.f32 %v2486, %v395
        %v2519 = vadd.f32 %v2487, %v396
        %v2520 = vadd.f32 %v2488, %v397
        %v2521 = vadd.f32 %v2489, %v398
        %v2522 = vadd.f32 %v2490, %v399
        %v2523 = vadd.f32 %v2491, %v400
        %v2524 = vadd.f32 %v2492, %v401
        %v2525 = vadd.f32 %v2493, %v402
        %v2526 = vadd.f32 %v2494, %v403
        %v2527 = vadd.f32 %v2495, %v404
        %v2528 = vadd.f32 %v2496, %v405
        %v2529 = vadd.f32 %v2497, %v406
        %v2530 = vadd.f32 %v2498, %v407
        %v2531 = vadd.f32 %v2499, %v408
        %v2532 = vadd.f32 %v2500, %v409
        %v2533 = vadd.f32 %v2501, %v410
        %v2534 = vadd.f32 %v2502, %v411
        %v2535 = vadd.f32 %v2503, %v412
        %v2536 = vadd.f32 %v2504, %v413
        %v2537 = vadd.f32 %v2505, %v414
        %v2538 = vadd.f32 %v2506, %v415
        %v2539 = vadd.f32 %v2507, %v416
        %v2540 = vadd.f32 %v2508, %v417
        %v2541 = vadd.f32 %v2509, %v418
        %v2542 = vadd.f32 %v2510, %v419
        %v2543 = vadd.f32 %v2511, %v420
        %v2544 = vadd.f32 %v2512, %v421
        %v2545 = vadd.f32 %v2513, %v422
        %v2546 = vadd.f32 %v2514, %v423
        %v2547 = vadd.f32 %v2515, %v424
        %v2548 = vadd.f32 %v2516, %v425
        %v2549 = vmax.f32 %v2517, 0.0
        %v2550 = vmax.f32 %v2518, 0.0
        %v2551 = vmax.f32 %v2519, 0.0
        %v2552 = vmax.f32 %v2520, 0.0
        %v2553 = vmax.f32 %v2521, 0.0
        %v2554 = vmax.f32 %v2522, 0.0
        %v2555 = vmax.f32 %v2523, 0.0
        %v2556 = vmax.f32 %v2524, 0.0
        %v2557 = vmax.f32 %v2525, 0.0
        %v2558 = vmax.f32 %v2526, 0.0
        %v2559 = vmax.f32 %v2527, 0.0
        %v2560 = vmax.f32 %v2528, 0.0
        %v2561 = vmax.f32 %v2529, 0.0
        %v2562 = vmax.f32 %v2530, 0.0
        %v2563 = vmax.f32 %v2531, 0.0
        %v2564 = vmax.f32 %v2532, 0.0
        %v2565 = vmax.f32 %v2533, 0.0
        %v2566 = vmax.f32 %v2534, 0.0
        %v2567 = vmax.f32 %v2535, 0.0
        %v2568 = vmax.f32 %v2536, 0.0
        %v2569 = vmax.f32 %v2537, 0.0
        %v2570 = vmax.f32 %v2538, 0.0
        %v2571 = vmax.f32 %v2539, 0.0
        %v2572 = vmax.f32 %v2540, 0.0
        %v2573 = vmax.f32 %v2541, 0.0
        %v2574 = vmax.f32 %v2542, 0.0
        %v2575 = vmax.f32 %v2543, 0.0
        %v2576 = vmax.f32 %v2544, 0.0
        %v2577 = vmax.f32 %v2545, 0.0
        %v2578 = vmax.f32 %v2546, 0.0
        %v2579 = vmax.f32 %v2547, 0.0
        %v2580 = vmax.f32 %v2548, 0.0
        %2581 = vst [vmem:[%s392] sm:$0xff] %v2549
        %2582 = vst [vmem:[%s392 + $0x8] sm:$0xff] %v2550
        %2583 = vst [vmem:[%s392 + $0x10] sm:$0xff] %v2551
        %2584 = vst [vmem:[%s392 + $0x18] sm:$0xff] %v2552
        %2585 = vst [vmem:[%s392 + $0x20] sm:$0xff] %v2553
        %2586 = vst [vmem:[%s392 + $0x28] sm:$0xff] %v2554
        %2587 = vst [vmem:[%s392 + $0x30] sm:$0xff] %v2555
        %2588 = vst [vmem:[%s392 + $0x38] sm:$0xff] %v2556
        %2589 = vst [vmem:[%s392 + $0x40] sm:$0xff] %v2557
        %2590 = vst [vmem:[%s392 + $0x48] sm:$0xff] %v2558
        %2591 = vst [vmem:[%s392 + $0x50] sm:$0xff] %v2559
        %2592 = vst [vmem:[%s392 + $0x58] sm:$0xff] %v2560
        %2593 = vst [vmem:[%s392 + $0x60] sm:$0xff] %v2561
        %2594 = vst [vmem:[%s392 + $0x68] sm:$0xff] %v2562
        %2595 = vst [vmem:[%s392 + $0x70] sm:$0xff] %v2563
        %2596 = vst [vmem:[%s392 + $0x78] sm:$0xff] %v2564
        %2597 = vst [vmem:[%s392 + $0x80] sm:$0xff] %v2565
        %2598 = vst [vmem:[%s392 + $0x88] sm:$0xff] %v2566
        %2599 = vst [vmem:[%s392 + $0x90] sm:$0xff] %v2567
        %2600 = vst [vmem:[%s392 + $0x98] sm:$0xff] %v2568
        %2601 = vst [vmem:[%s392 + $0xa0] sm:$0xff] %v2569
        %2602 = vst [vmem:[%s392 + $0xa8] sm:$0xff] %v2570
        %2603 = vst [vmem:[%s392 + $0xb0] sm:$0xff] %v2571
        %2604 = vst [vmem:[%s392 + $0xb8] sm:$0xff] %v2572
        %2605 = vst [vmem:[%s392 + $0xc0] sm:$0xff] %v2573
        %2606 = vst [vmem:[%s392 + $0xc8] sm:$0xff] %v2574
        %2607 = vst [vmem:[%s392 + $0xd0] sm:$0xff] %v2575
        %2608 = vst [vmem:[%s392 + $0xd8] sm:$0xff] %v2576
        %2609 = vst [vmem:[%s392 + $0xe0] sm:$0xff] %v2577
        %2610 = vst [vmem:[%s392 + $0xe8] sm:$0xff] %v2578
        %2611 = vst [vmem:[%s392 + $0xf0] sm:$0xff] %v2579
        %2612 = vst [vmem:[%s392 + $0xf8] sm:$0xff] %v2580
        %s2613 = sand.u32 %s251, 1
        %s2614 = scalar_lea.sflag [#allocation4], %s2613
        %s2615 = sand.u32 %s251, 1
        %s2616 = smul.addr %s2615, 256
        %s2617 = scalar_lea.vmem [#allocation7], %s2616
        // Predicated region
        $region69: #{bottleneck_forward.1} parent=59 // pred_check
          %p2618 = pneg %p261
        $region70: #{bottleneck_forward.1} parent=59 // pred_check_branch
          %2620 = sbr.rel (%p2618) target = $region72
        $region71: #{bottleneck_forward.1} parent=59 // pred_region
          %s2622 = ssub.s32 4096, 4096
          %2623 = vsyncadd %s2614, %s2622
          %s2624 = smul.addr %s28, 32
          %s2625 = smul.addr %s2624, 128
          %s2626 = scalar_lea.hbm %s10, %s2625
          %s2627 = sshll.u32 %s2617, 4
          %s2628 = int_to_ptr.vmem [resolvable:$true] %s2627
          %2633 = dma.vmem_to_hbm [thread:$0]  %s2628, 4096, %s2626, %s2614, 128, 128, 8
        $region72: #{bottleneck_forward.1} parent=59 // pred_fallthru
          _
      $region60: #{bottleneck_forward.1} parent=5 // pred_fallthru
        _
      %p2634 = scmp.le.s32.totalorder 2, %s23
      // Predicated region
      $region73: #{bottleneck_forward.1} parent=5 // pred_check
        %p2635 = pneg %p2634
      $region74: #{bottleneck_forward.1} parent=5 // pred_check_branch
        %2637 = sbr.rel (%p2635) target = $region76
      $region75: #{bottleneck_forward.1} parent=5 // pred_region
        %s2638 = ssub.s32 %s23, 2
        // Predicated region
        $region77: #{bottleneck_forward.1} parent=75 // pred_check
          %p2639 = pneg %p267
        $region78: #{bottleneck_forward.1} parent=75 // pred_check_branch
          %2641 = sbr.rel (%p2639) target = $region80
        $region79: #{bottleneck_forward.1} parent=75 // pred_region
          %s2642 = sand.u32 %s252, 1
          %s2643 = scalar_lea.sflag [#allocation4], %s2642
          %s2644 = sand.u32 %s252, 1
          %s2645 = smul.addr %s2644, 256
          %s2646 = scalar_lea.vmem [#allocation7], %s2645
          %2647 = dma.done %s2643, 4096
        $region80: #{bottleneck_forward.1} parent=75 // pred_fallthru
          _
      $region76: #{bottleneck_forward.1} parent=5 // pred_fallthru
        _
    $region6: #{bottleneck_forward.1} parent=1 // loop_footer
      %s27 = sadd.s32 1, %s23
    $region7: #{bottleneck_forward.1} parent=1 // loop_footer_branch
      %22 = sbr.rel target = $region3
    $region8: #{bottleneck_forward.1} parent=1 // loop_exit
      _
    %2648 = vsyncpa [#allocation3], 1
    %s2649 = scalar_lea.sflag [#allocation3], 1
    %2650 = vsyncpa %s2649, 1
    %2651 = vsyncpa [#allocation6], 1
    %2652 = vsyncpa [#allocation4], 1
    %s2653 = scalar_lea.sflag [#allocation4], 1
    %2654 = vsyncpa %s2653, 1

</llo_original>
